<compile_context>
chip_gen: v5e
topology: v5e:2x2
jax: 0.10.0
libtpu: 0.0.40
codegen_flags: <defaults>
</compile_context>

<pallas_src>
import jax
import jax.numpy as jnp
from jax import lax
from jax.experimental import pallas as pl
from jax.experimental.pallas import tpu as pltpu
import numpy as np


def _downsample_kernel(pee_ref, peo_ref, poe_ref, poo_ref,
                       hoe_ref, hoo_ref, keep_ref, w_ref, b_ref, out_ref):
    """One (batch image, spatial row-tile) grid step.

    pee/peo/poe/poo_ref : (1, C_in, TS)   stride-2 parity planes, flattened
                          over whole output rows (TS = TH * Wo).
    hoe/hoo_ref         : (1, 1, C_in, Wo) the output row just above this tile
                          of the odd-row planes (zeros for the first tile) --
                          feeds the ky=0 conv taps.
    keep_ref            : (1, TS)  1.0 where wo != 0, 0.0 at wo == 0 (left pad).
    w_ref               : (C_conv, 9*C_in)  column k*C_in+ci holds
                          w_oihw[:, ci, ky, kx] with k = ky*3 + kx.
    b_ref               : (C_conv, 1) bias.
    out_ref             : (1, C_out, TS)  conv channels then pool channels.
    """
    C_in = pee_ref.shape[1]
    C_out = out_ref.shape[1]
    C_conv = C_out - C_in
    TS = out_ref.shape[2]
    Wo = hoe_ref.shape[3]

    pee = pee_ref[0]          # (C_in, TS)
    peo = peo_ref[0]
    poe = poe_ref[0]
    poo = poo_ref[0]
    hoe = hoe_ref[0, 0]       # (C_in, Wo)
    hoo = hoo_ref[0, 0]
    keep = keep_ref[...]      # (1, TS)

    # ky = 0 taps: value at output row ho is plane[ho - 1]; the tile's first
    # row comes from the halo input (zeros for the very first tile == top pad).
    if TS == Wo:              # single-row tile
        q_oe, q_oo = hoe, hoo
    else:
        q_oe = jnp.concatenate([hoe, poe[:, :TS - Wo]], axis=-1)
        q_oo = jnp.concatenate([hoo, poo[:, :TS - Wo]], axis=-1)

    def shift_col(t):
        # value at (ho, wo) is t[ho, wo - 1]; zero at wo == 0 (left zero pad).
        z = jnp.zeros((C_in, 1), jnp.float32)
        return jnp.concatenate([z, t[:, :TS - 1]], axis=-1) * keep

    # 3x3 conv taps, tap index k = ky*3 + kx, each (C_in, TS), all aligned.
    taps = (
        shift_col(q_oo),      # (0, 0)
        q_oe,                 # (0, 1)
        q_oo,                 # (0, 2)
        shift_col(peo),       # (1, 0)
        pee,                  # (1, 1)
        peo,                  # (1, 2)
        shift_col(poo),       # (2, 0)
        poe,                  # (2, 1)
        poo,                  # (2, 2)
    )

    if C_in * C_conv >= 64:
        # Enough channels to make the MXU worthwhile: one systolic contraction.
        tap_mat = jnp.concatenate(taps, axis=0)                   # (9*C_in, TS)
        conv = jnp.dot(w_ref[...], tap_mat,
                       preferred_element_type=jnp.float32)        # (C_conv, TS)
    else:
        # Tiny channels: unrolled VPU FMAs with 4 independent partial
        # accumulators (breaks the long serial add chain; fills VALU slots).
        n_parts = 4
        parts = [jnp.zeros((C_conv, TS), jnp.float32) for _ in range(n_parts)]
        j = 0
        for k in range(9):
            tk = taps[k]
            for ci in range(C_in):
                col = k * C_in + ci
                w_col = w_ref[:, col:col + 1]                     # (C_conv, 1)
                parts[j % n_parts] = parts[j % n_parts] + w_col * tk[ci:ci + 1, :]
                j += 1
        conv = (parts[0] + parts[1]) + (parts[2] + parts[3])
    conv = conv + b_ref[...]

    # 2x2 stride-2 max pool == elementwise max of the 4 parity planes.
    pool = jnp.maximum(jnp.maximum(pee, peo), jnp.maximum(poe, poo))

    # relu(cat(conv, pool)) -- two grouped, lane-dense stores.
    out_ref[0, :C_conv, :] = jnp.maximum(conv, 0.0)
    out_ref[0, C_conv:, :] = jnp.maximum(pool, 0.0)


def _round_up(v, m):
    return -(-v // m) * m


def _choose_tile_s(n_batch, Ho, Wo, C_in, C_out,
                   budget_bytes=16 * 1024 * 1024):
    """Pick the flattened spatial tile (in output elements).

    Tiles cover whole output rows (TILE_S = TH*Wo, TH | Ho) and are lane-dense
    (TILE_S % 128 == 0, or the full image).  The VMEM footprint models (8,128)
    tiling padding of every block plus double buffering.
    """
    S = Ho * Wo

    def footprint(ts):
        lane = _round_up(ts, 128)
        planes = 4 * _round_up(C_in, 8) * lane
        out = _round_up(C_out, 8) * lane
        keep = 8 * lane
        halos = 2 * _round_up(C_in, 8) * _round_up(Wo, 128)
        return 2 * 4 * (planes + out + keep + halos)   # double-buffered f32

    cands = []
    for th in range(1, Ho + 1):
        if Ho % th:
            continue
        ts = th * Wo
        if ts % 128 == 0 or ts == S:
            cands.append(ts)
    fitting = [t for t in cands if footprint(t) <= budget_bytes]
    if fitting:
        if n_batch == 1:
            # Keep >= 2 grid steps on the parallel axes so both v7x
            # TensorCores get work.
            sub = [t for t in fitting if t < S]
            if sub:
                return max(sub)
        return max(fitting)
    return min(cands)   # best effort for awkward shapes


def downsample_block(x_nchw, w_oihw, bias, *, tile_s=None,
                     vmem_budget_bytes=16 * 1024 * 1024):
    """relu(cat(conv3x3_s2_p1(x), maxpool2x2_s2(x)), dim=1); NCHW in / out."""
    N, C_in, H, W = x_nchw.shape
    C_conv, C_in_w, KH, KW = w_oihw.shape
    assert (C_in_w, KH, KW) == (C_in, 3, 3)
    assert H % 2 == 0 and W % 2 == 0, "even spatial dims expected"
    C_out = C_conv + C_in
    Ho, Wo = H // 2, W // 2
    S = Ho * Wo

    x = x_nchw.astype(jnp.float32)

    # Stride-2 parity planes (pure de-interleave, ~1x input bytes, no pad).
    p_ee4 = x[:, :, 0::2, 0::2]           # x[2ho,   2wo]
    p_eo4 = x[:, :, 0::2, 1::2]           # x[2ho,   2wo+1]
    p_oe4 = x[:, :, 1::2, 0::2]           # x[2ho+1, 2wo]
    p_oo4 = x[:, :, 1::2, 1::2]           # x[2ho+1, 2wo+1]

    if tile_s is None:
        tile_s = _choose_tile_s(N, Ho, Wo, C_in, C_out, vmem_budget_bytes)
    assert S % tile_s == 0 and tile_s % Wo == 0, (tile_s, Wo, S)
    assert tile_s % 128 == 0 or tile_s == S, tile_s
    TH = tile_s // Wo
    nT = Ho // TH

    # Tiny per-tile halo rows (the odd row just above each tile) for the
    # ky = 0 conv taps; zeros for the first tile (top zero padding).
    def make_halo(plane4d):
        sel = plane4d[:, :, TH - 1:Ho - 1:TH, :]                  # (N,C,nT-1,Wo)
        sel = jnp.pad(sel, ((0, 0), (0, 0), (1, 0), (0, 0)))      # (N,C,nT,Wo)
        return sel.transpose(0, 2, 1, 3)                          # (N,nT,C,Wo)

    halo_oe = make_halo(p_oe4)
    halo_oo = make_halo(p_oo4)

    p_ee = p_ee4.reshape(N, C_in, S)
    p_eo = p_eo4.reshape(N, C_in, S)
    p_oe = p_oe4.reshape(N, C_in, S)
    p_oo = p_oo4.reshape(N, C_in, S)

    # 1.0 inside a row, 0.0 at wo == 0 (the left zero-padding of the conv).
    keep_np = np.ones((Ho, Wo), np.float32)
    keep_np[:, 0] = 0.0
    keep = jnp.asarray(keep_np.reshape(1, S))

    # Weight column k*C_in + ci  <->  tap k = ky*3 + kx, input channel ci.
    w_mat = jnp.asarray(w_oihw, jnp.float32).transpose(0, 2, 3, 1)
    w_mat = w_mat.reshape(C_conv, 9 * C_in)
    b_col = jnp.asarray(bias, jnp.float32).reshape(C_conv, 1)

    plane_spec = pl.BlockSpec((1, C_in, tile_s), lambda n, s: (n, 0, s))
    halo_spec = pl.BlockSpec((1, 1, C_in, Wo), lambda n, s: (n, s, 0, 0))
    keep_spec = pl.BlockSpec((1, tile_s), lambda n, s: (0, s))
    w_spec = pl.BlockSpec((C_conv, 9 * C_in), lambda n, s: (0, 0))
    b_spec = pl.BlockSpec((C_conv, 1), lambda n, s: (0, 0))
    out_spec = pl.BlockSpec((1, C_out, tile_s), lambda n, s: (n, 0, s))

    out = pl.pallas_call(
        _downsample_kernel,
        out_shape=jax.ShapeDtypeStruct((N, C_out, S), jnp.float32),
        grid_spec=pl.GridSpec(
            grid=(N, nT),
            in_specs=[plane_spec, plane_spec, plane_spec, plane_spec,
                      halo_spec, halo_spec, keep_spec, w_spec, b_spec],
            out_specs=out_spec,
        ),
        compiler_params=pltpu.CompilerParams(
            dimension_semantics=("parallel", "parallel"),
            vmem_limit_bytes=32 * 1024 * 1024),
    )(p_ee, p_eo, p_oe, p_oo, halo_oe, halo_oo, keep, w_mat, b_col)

    # Free metadata reshape back to NCHW (no transpose needed).
    return out.reshape(N, C_out, Ho, Wo)


def _reference(x_nchw, w_oihw, bias):
    conv = lax.conv_general_dilated(
        x_nchw, w_oihw, window_strides=(2, 2),
        padding=((1, 1), (1, 1)),
        dimension_numbers=("NCHW", "OIHW", "NCHW"),
        precision=lax.Precision.HIGHEST)
    conv = conv + bias[None, :, None, None]
    pool = lax.reduce_window(x_nchw, -jnp.inf, lax.max,
                             (1, 1, 2, 2), (1, 1, 2, 2), "VALID")
    return jnp.maximum(jnp.concatenate([conv, pool], axis=1), 0.0)


if __name__ == "__main__":
    key = jax.random.PRNGKey(0)
    N, C_in, H, W = 2, 4, 16, 16
    C_out = 8
    C_conv = C_out - C_in

    kx_, kw_, kb_ = jax.random.split(key, 3)
    x = jax.random.normal(kx_, (N, C_in, H, W), dtype=jnp.float32)
    w = jax.random.normal(kw_, (C_conv, C_in, 3, 3), dtype=jnp.float32) * 0.1
    b = jax.random.normal(kb_, (C_conv,), dtype=jnp.float32) * 0.1

    out = jax.block_until_ready(downsample_block(x, w, b))
    ref = _reference(x, w, b)
    assert out.shape == (N, C_out, H // 2, W // 2), out.shape
    assert np.allclose(np.asarray(out), np.asarray(ref), atol=1e-4, rtol=1e-4)

    # Also exercise the multi-tile / halo path with 128-lane-dense tiles.
    x2 = jax.random.normal(kx_, (1, C_in, 64, 64), dtype=jnp.float32)
    out2 = jax.block_until_ready(downsample_block(x2, w, b, tile_s=256))
    ref2 = _reference(x2, w, b)
    assert np.allclose(np.asarray(out2), np.asarray(ref2), atol=1e-4, rtol=1e-4)

    print("KERNEL_OK")
</pallas_src>

<mosaic_0001>
module attributes {stable_mosaic.version = 11 : i64} {
  func.func @_downsample_kernel(%arg0: i32, %arg1: i32, %arg2: memref<1x4x64xf32, #tpu.memory_space<vmem>>, %arg3: memref<1x4x64xf32, #tpu.memory_space<vmem>>, %arg4: memref<1x4x64xf32, #tpu.memory_space<vmem>>, %arg5: memref<1x4x64xf32, #tpu.memory_space<vmem>>, %arg6: memref<1x1x4x8xf32, #tpu.memory_space<vmem>>, %arg7: memref<1x1x4x8xf32, #tpu.memory_space<vmem>>, %arg8: memref<1x64xf32, #tpu.memory_space<vmem>>, %arg9: memref<4x36xf32, #tpu.memory_space<vmem>>, %arg10: memref<4x1xf32, #tpu.memory_space<vmem>>, %arg11: memref<1x8x64xf32, #tpu.memory_space<vmem>>) attributes {dimension_semantics = [#tpu.dimension_semantics<parallel>, #tpu.dimension_semantics<parallel>], iteration_bounds = array<i64: 2, 1>, scalar_prefetch = 0 : i64, scratch_operands = 0 : i64, tpu.core_type = #tpu.core_type<tc>, window_params = [{transform_indices = @transform_0, window_bounds = array<i64: 1, 4, 64>}, {transform_indices = @transform_1, window_bounds = array<i64: 1, 4, 64>}, {transform_indices = @transform_2, window_bounds = array<i64: 1, 4, 64>}, {transform_indices = @transform_3, window_bounds = array<i64: 1, 4, 64>}, {transform_indices = @transform_4, window_bounds = array<i64: 1, 1, 4, 8>}, {transform_indices = @transform_5, window_bounds = array<i64: 1, 1, 4, 8>}, {transform_indices = @transform_6, window_bounds = array<i64: 1, 64>}, {pipeline_mode = #tpu.pipeline_mode<synchronous>, transform_indices = @transform_7, window_bounds = array<i64: 4, 36>}, {pipeline_mode = #tpu.pipeline_mode<synchronous>, transform_indices = @transform_8, window_bounds = array<i64: 4, 1>}, {transform_indices = @transform_9, window_bounds = array<i64: 1, 8, 64>}]} {
    %c0 = arith.constant 0 : index
    %c0_0 = arith.constant 0 : index
    %c0_1 = arith.constant 0 : index
    %0 = vector.load %arg2[%c0, %c0_0, %c0_1] : memref<1x4x64xf32, #tpu.memory_space<vmem>>, vector<1x4x64xf32>
    %1 = vector.shape_cast %0 : vector<1x4x64xf32> to vector<4x64xf32>
    %c0_2 = arith.constant 0 : index
    %c0_3 = arith.constant 0 : index
    %c0_4 = arith.constant 0 : index
    %2 = vector.load %arg3[%c0_2, %c0_3, %c0_4] : memref<1x4x64xf32, #tpu.memory_space<vmem>>, vector<1x4x64xf32>
    %3 = vector.shape_cast %2 : vector<1x4x64xf32> to vector<4x64xf32>
    %c0_5 = arith.constant 0 : index
    %c0_6 = arith.constant 0 : index
    %c0_7 = arith.constant 0 : index
    %4 = vector.load %arg4[%c0_5, %c0_6, %c0_7] : memref<1x4x64xf32, #tpu.memory_space<vmem>>, vector<1x4x64xf32>
    %5 = vector.shape_cast %4 : vector<1x4x64xf32> to vector<4x64xf32>
    %c0_8 = arith.constant 0 : index
    %c0_9 = arith.constant 0 : index
    %c0_10 = arith.constant 0 : index
    %6 = vector.load %arg5[%c0_8, %c0_9, %c0_10] : memref<1x4x64xf32, #tpu.memory_space<vmem>>, vector<1x4x64xf32>
    %7 = vector.shape_cast %6 : vector<1x4x64xf32> to vector<4x64xf32>
    %c0_11 = arith.constant 0 : index
    %c0_12 = arith.constant 0 : index
    %c0_13 = arith.constant 0 : index
    %c0_14 = arith.constant 0 : index
    %8 = vector.load %arg6[%c0_11, %c0_12, %c0_13, %c0_14] : memref<1x1x4x8xf32, #tpu.memory_space<vmem>>, vector<1x1x4x8xf32>
    %9 = vector.shape_cast %8 : vector<1x1x4x8xf32> to vector<4x8xf32>
    %c0_15 = arith.constant 0 : index
    %c0_16 = arith.constant 0 : index
    %c0_17 = arith.constant 0 : index
    %c0_18 = arith.constant 0 : index
    %10 = vector.load %arg7[%c0_15, %c0_16, %c0_17, %c0_18] : memref<1x1x4x8xf32, #tpu.memory_space<vmem>>, vector<1x1x4x8xf32>
    %11 = vector.shape_cast %10 : vector<1x1x4x8xf32> to vector<4x8xf32>
    %c0_19 = arith.constant 0 : index
    %c0_20 = arith.constant 0 : index
    %12 = vector.load %arg8[%c0_19, %c0_20] : memref<1x64xf32, #tpu.memory_space<vmem>>, vector<1x64xf32>
    %13 = vector.extract_strided_slice %5 {offsets = [0, 0], sizes = [4, 56], strides = [1, 1]} : vector<4x64xf32> to vector<4x56xf32>
    %14 = tpu.concatenate %9, %13 in 1 : vector<4x8xf32>, vector<4x56xf32> -> vector<4x64xf32>
    %15 = vector.extract_strided_slice %7 {offsets = [0, 0], sizes = [4, 56], strides = [1, 1]} : vector<4x64xf32> to vector<4x56xf32>
    %16 = tpu.concatenate %11, %15 in 1 : vector<4x8xf32>, vector<4x56xf32> -> vector<4x64xf32>
    %cst = arith.constant 0.000000e+00 : f32
    %17 = vector.broadcast %cst : f32 to vector<4x1xf32>
    %18 = vector.extract_strided_slice %16 {offsets = [0, 0], sizes = [4, 63], strides = [1, 1]} : vector<4x64xf32> to vector<4x63xf32>
    %19 = tpu.concatenate %17, %18 in 1 : vector<4x1xf32>, vector<4x63xf32> -> vector<4x64xf32>
    %20 = vector.broadcast %12 : vector<1x64xf32> to vector<4x64xf32>
    %21 = arith.mulf %19, %20 : vector<4x64xf32>
    %cst_21 = arith.constant 0.000000e+00 : f32
    %22 = vector.broadcast %cst_21 : f32 to vector<4x1xf32>
    %23 = vector.extract_strided_slice %3 {offsets = [0, 0], sizes = [4, 63], strides = [1, 1]} : vector<4x64xf32> to vector<4x63xf32>
    %24 = tpu.concatenate %22, %23 in 1 : vector<4x1xf32>, vector<4x63xf32> -> vector<4x64xf32>
    %25 = vector.broadcast %12 : vector<1x64xf32> to vector<4x64xf32>
    %26 = arith.mulf %24, %25 : vector<4x64xf32>
    %cst_22 = arith.constant 0.000000e+00 : f32
    %27 = vector.broadcast %cst_22 : f32 to vector<4x1xf32>
    %28 = vector.extract_strided_slice %7 {offsets = [0, 0], sizes = [4, 63], strides = [1, 1]} : vector<4x64xf32> to vector<4x63xf32>
    %29 = tpu.concatenate %27, %28 in 1 : vector<4x1xf32>, vector<4x63xf32> -> vector<4x64xf32>
    %30 = vector.broadcast %12 : vector<1x64xf32> to vector<4x64xf32>
    %31 = arith.mulf %29, %30 : vector<4x64xf32>
    %cst_23 = arith.constant 0.000000e+00 : f32
    %32 = vector.broadcast %cst_23 : f32 to vector<4x64xf32>
    %cst_24 = arith.constant 0.000000e+00 : f32
    %33 = vector.broadcast %cst_24 : f32 to vector<4x64xf32>
    %cst_25 = arith.constant 0.000000e+00 : f32
    %34 = vector.broadcast %cst_25 : f32 to vector<4x64xf32>
    %cst_26 = arith.constant 0.000000e+00 : f32
    %35 = vector.broadcast %cst_26 : f32 to vector<4x64xf32>
    %c0_27 = arith.constant 0 : index
    %c0_28 = arith.constant 0 : index
    %36 = vector.load %arg9[%c0_27, %c0_28] : memref<4x36xf32, #tpu.memory_space<vmem>>, vector<4x1xf32>
    %37 = vector.extract_strided_slice %21 {offsets = [0, 0], sizes = [1, 64], strides = [1, 1]} : vector<4x64xf32> to vector<1x64xf32>
    %38 = vector.broadcast %36 : vector<4x1xf32> to vector<4x64xf32>
    %39 = vector.broadcast %37 : vector<1x64xf32> to vector<4x64xf32>
    %40 = arith.mulf %38, %39 : vector<4x64xf32>
    %41 = arith.addf %32, %40 : vector<4x64xf32>
    %c0_29 = arith.constant 0 : index
    %c1 = arith.constant 1 : index
    %42 = vector.load %arg9[%c0_29, %c1] : memref<4x36xf32, #tpu.memory_space<vmem>>, vector<4x1xf32>
    %43 = vector.extract_strided_slice %21 {offsets = [1, 0], sizes = [1, 64], strides = [1, 1]} : vector<4x64xf32> to vector<1x64xf32>
    %44 = vector.broadcast %42 : vector<4x1xf32> to vector<4x64xf32>
    %45 = vector.broadcast %43 : vector<1x64xf32> to vector<4x64xf32>
    %46 = arith.mulf %44, %45 : vector<4x64xf32>
    %47 = arith.addf %33, %46 : vector<4x64xf32>
    %c0_30 = arith.constant 0 : index
    %c2 = arith.constant 2 : index
    %48 = vector.load %arg9[%c0_30, %c2] : memref<4x36xf32, #tpu.memory_space<vmem>>, vector<4x1xf32>
    %49 = vector.extract_strided_slice %21 {offsets = [2, 0], sizes = [1, 64], strides = [1, 1]} : vector<4x64xf32> to vector<1x64xf32>
    %50 = vector.broadcast %48 : vector<4x1xf32> to vector<4x64xf32>
    %51 = vector.broadcast %49 : vector<1x64xf32> to vector<4x64xf32>
    %52 = arith.mulf %50, %51 : vector<4x64xf32>
    %53 = arith.addf %34, %52 : vector<4x64xf32>
    %c0_31 = arith.constant 0 : index
    %c3 = arith.constant 3 : index
    %54 = vector.load %arg9[%c0_31, %c3] : memref<4x36xf32, #tpu.memory_space<vmem>>, vector<4x1xf32>
    %55 = vector.extract_strided_slice %21 {offsets = [3, 0], sizes = [1, 64], strides = [1, 1]} : vector<4x64xf32> to vector<1x64xf32>
    %56 = vector.broadcast %54 : vector<4x1xf32> to vector<4x64xf32>
    %57 = vector.broadcast %55 : vector<1x64xf32> to vector<4x64xf32>
    %58 = arith.mulf %56, %57 : vector<4x64xf32>
    %59 = arith.addf %35, %58 : vector<4x64xf32>
    %c0_32 = arith.constant 0 : index
    %c4 = arith.constant 4 : index
    %60 = vector.load %arg9[%c0_32, %c4] : memref<4x36xf32, #tpu.memory_space<vmem>>, vector<4x1xf32>
    %61 = vector.extract_strided_slice %14 {offsets = [0, 0], sizes = [1, 64], strides = [1, 1]} : vector<4x64xf32> to vector<1x64xf32>
    %62 = vector.broadcast %60 : vector<4x1xf32> to vector<4x64xf32>
    %63 = vector.broadcast %61 : vector<1x64xf32> to vector<4x64xf32>
    %64 = arith.mulf %62, %63 : vector<4x64xf32>
    %65 = arith.addf %41, %64 : vector<4x64xf32>
    %c0_33 = arith.constant 0 : index
    %c5 = arith.constant 5 : index
    %66 = vector.load %arg9[%c0_33, %c5] : memref<4x36xf32, #tpu.memory_space<vmem>>, vector<4x1xf32>
    %67 = vector.extract_strided_slice %14 {offsets = [1, 0], sizes = [1, 64], strides = [1, 1]} : vector<4x64xf32> to vector<1x64xf32>
    %68 = vector.broadcast %66 : vector<4x1xf32> to vector<4x64xf32>
    %69 = vector.broadcast %67 : vector<1x64xf32> to vector<4x64xf32>
    %70 = arith.mulf %68, %69 : vector<4x64xf32>
    %71 = arith.addf %47, %70 : vector<4x64xf32>
    %c0_34 = arith.constant 0 : index
    %c6 = arith.constant 6 : index
    %72 = vector.load %arg9[%c0_34, %c6] : memref<4x36xf32, #tpu.memory_space<vmem>>, vector<4x1xf32>
    %73 = vector.extract_strided_slice %14 {offsets = [2, 0], sizes = [1, 64], strides = [1, 1]} : vector<4x64xf32> to vector<1x64xf32>
    %74 = vector.broadcast %72 : vector<4x1xf32> to vector<4x64xf32>
    %75 = vector.broadcast %73 : vector<1x64xf32> to vector<4x64xf32>
    %76 = arith.mulf %74, %75 : vector<4x64xf32>
    %77 = arith.addf %53, %76 : vector<4x64xf32>
    %c0_35 = arith.constant 0 : index
    %c7 = arith.constant 7 : index
    %78 = vector.load %arg9[%c0_35, %c7] : memref<4x36xf32, #tpu.memory_space<vmem>>, vector<4x1xf32>
    %79 = vector.extract_strided_slice %14 {offsets = [3, 0], sizes = [1, 64], strides = [1, 1]} : vector<4x64xf32> to vector<1x64xf32>
    %80 = vector.broadcast %78 : vector<4x1xf32> to vector<4x64xf32>
    %81 = vector.broadcast %79 : vector<1x64xf32> to vector<4x64xf32>
    %82 = arith.mulf %80, %81 : vector<4x64xf32>
    %83 = arith.addf %59, %82 : vector<4x64xf32>
    %c0_36 = arith.constant 0 : index
    %c8 = arith.constant 8 : index
    %84 = vector.load %arg9[%c0_36, %c8] : memref<4x36xf32, #tpu.memory_space<vmem>>, vector<4x1xf32>
    %85 = vector.extract_strided_slice %16 {offsets = [0, 0], sizes = [1, 64], strides = [1, 1]} : vector<4x64xf32> to vector<1x64xf32>
    %86 = vector.broadcast %84 : vector<4x1xf32> to vector<4x64xf32>
    %87 = vector.broadcast %85 : vector<1x64xf32> to vector<4x64xf32>
    %88 = arith.mulf %86, %87 : vector<4x64xf32>
    %89 = arith.addf %65, %88 : vector<4x64xf32>
    %c0_37 = arith.constant 0 : index
    %c9 = arith.constant 9 : index
    %90 = vector.load %arg9[%c0_37, %c9] : memref<4x36xf32, #tpu.memory_space<vmem>>, vector<4x1xf32>
    %91 = vector.extract_strided_slice %16 {offsets = [1, 0], sizes = [1, 64], strides = [1, 1]} : vector<4x64xf32> to vector<1x64xf32>
    %92 = vector.broadcast %90 : vector<4x1xf32> to vector<4x64xf32>
    %93 = vector.broadcast %91 : vector<1x64xf32> to vector<4x64xf32>
    %94 = arith.mulf %92, %93 : vector<4x64xf32>
    %95 = arith.addf %71, %94 : vector<4x64xf32>
    %c0_38 = arith.constant 0 : index
    %c10 = arith.constant 10 : index
    %96 = vector.load %arg9[%c0_38, %c10] : memref<4x36xf32, #tpu.memory_space<vmem>>, vector<4x1xf32>
    %97 = vector.extract_strided_slice %16 {offsets = [2, 0], sizes = [1, 64], strides = [1, 1]} : vector<4x64xf32> to vector<1x64xf32>
    %98 = vector.broadcast %96 : vector<4x1xf32> to vector<4x64xf32>
    %99 = vector.broadcast %97 : vector<1x64xf32> to vector<4x64xf32>
    %100 = arith.mulf %98, %99 : vector<4x64xf32>
    %101 = arith.addf %77, %100 : vector<4x64xf32>
    %c0_39 = arith.constant 0 : index
    %c11 = arith.constant 11 : index
    %102 = vector.load %arg9[%c0_39, %c11] : memref<4x36xf32, #tpu.memory_space<vmem>>, vector<4x1xf32>
    %103 = vector.extract_strided_slice %16 {offsets = [3, 0], sizes = [1, 64], strides = [1, 1]} : vector<4x64xf32> to vector<1x64xf32>
    %104 = vector.broadcast %102 : vector<4x1xf32> to vector<4x64xf32>
    %105 = vector.broadcast %103 : vector<1x64xf32> to vector<4x64xf32>
    %106 = arith.mulf %104, %105 : vector<4x64xf32>
    %107 = arith.addf %83, %106 : vector<4x64xf32>
    %c0_40 = arith.constant 0 : index
    %c12 = arith.constant 12 : index
    %108 = vector.load %arg9[%c0_40, %c12] : memref<4x36xf32, #tpu.memory_space<vmem>>, vector<4x1xf32>
    %109 = vector.extract_strided_slice %26 {offsets = [0, 0], sizes = [1, 64], strides = [1, 1]} : vector<4x64xf32> to vector<1x64xf32>
    %110 = vector.broadcast %108 : vector<4x1xf32> to vector<4x64xf32>
    %111 = vector.broadcast %109 : vector<1x64xf32> to vector<4x64xf32>
    %112 = arith.mulf %110, %111 : vector<4x64xf32>
    %113 = arith.addf %89, %112 : vector<4x64xf32>
    %c0_41 = arith.constant 0 : index
    %c13 = arith.constant 13 : index
    %114 = vector.load %arg9[%c0_41, %c13] : memref<4x36xf32, #tpu.memory_space<vmem>>, vector<4x1xf32>
    %115 = vector.extract_strided_slice %26 {offsets = [1, 0], sizes = [1, 64], strides = [1, 1]} : vector<4x64xf32> to vector<1x64xf32>
    %116 = vector.broadcast %114 : vector<4x1xf32> to vector<4x64xf32>
    %117 = vector.broadcast %115 : vector<1x64xf32> to vector<4x64xf32>
    %118 = arith.mulf %116, %117 : vector<4x64xf32>
    %119 = arith.addf %95, %118 : vector<4x64xf32>
    %c0_42 = arith.constant 0 : index
    %c14 = arith.constant 14 : index
    %120 = vector.load %arg9[%c0_42, %c14] : memref<4x36xf32, #tpu.memory_space<vmem>>, vector<4x1xf32>
    %121 = vector.extract_strided_slice %26 {offsets = [2, 0], sizes = [1, 64], strides = [1, 1]} : vector<4x64xf32> to vector<1x64xf32>
    %122 = vector.broadcast %120 : vector<4x1xf32> to vector<4x64xf32>
    %123 = vector.broadcast %121 : vector<1x64xf32> to vector<4x64xf32>
    %124 = arith.mulf %122, %123 : vector<4x64xf32>
    %125 = arith.addf %101, %124 : vector<4x64xf32>
    %c0_43 = arith.constant 0 : index
    %c15 = arith.constant 15 : index
    %126 = vector.load %arg9[%c0_43, %c15] : memref<4x36xf32, #tpu.memory_space<vmem>>, vector<4x1xf32>
    %127 = vector.extract_strided_slice %26 {offsets = [3, 0], sizes = [1, 64], strides = [1, 1]} : vector<4x64xf32> to vector<1x64xf32>
    %128 = vector.broadcast %126 : vector<4x1xf32> to vector<4x64xf32>
    %129 = vector.broadcast %127 : vector<1x64xf32> to vector<4x64xf32>
    %130 = arith.mulf %128, %129 : vector<4x64xf32>
    %131 = arith.addf %107, %130 : vector<4x64xf32>
    %c0_44 = arith.constant 0 : index
    %c16 = arith.constant 16 : index
    %132 = vector.load %arg9[%c0_44, %c16] : memref<4x36xf32, #tpu.memory_space<vmem>>, vector<4x1xf32>
    %133 = vector.extract_strided_slice %1 {offsets = [0, 0], sizes = [1, 64], strides = [1, 1]} : vector<4x64xf32> to vector<1x64xf32>
    %134 = vector.broadcast %132 : vector<4x1xf32> to vector<4x64xf32>
    %135 = vector.broadcast %133 : vector<1x64xf32> to vector<4x64xf32>
    %136 = arith.mulf %134, %135 : vector<4x64xf32>
    %137 = arith.addf %113, %136 : vector<4x64xf32>
    %c0_45 = arith.constant 0 : index
    %c17 = arith.constant 17 : index
    %138 = vector.load %arg9[%c0_45, %c17] : memref<4x36xf32, #tpu.memory_space<vmem>>, vector<4x1xf32>
    %139 = vector.extract_strided_slice %1 {offsets = [1, 0], sizes = [1, 64], strides = [1, 1]} : vector<4x64xf32> to vector<1x64xf32>
    %140 = vector.broadcast %138 : vector<4x1xf32> to vector<4x64xf32>
    %141 = vector.broadcast %139 : vector<1x64xf32> to vector<4x64xf32>
    %142 = arith.mulf %140, %141 : vector<4x64xf32>
    %143 = arith.addf %119, %142 : vector<4x64xf32>
    %c0_46 = arith.constant 0 : index
    %c18 = arith.constant 18 : index
    %144 = vector.load %arg9[%c0_46, %c18] : memref<4x36xf32, #tpu.memory_space<vmem>>, vector<4x1xf32>
    %145 = vector.extract_strided_slice %1 {offsets = [2, 0], sizes = [1, 64], strides = [1, 1]} : vector<4x64xf32> to vector<1x64xf32>
    %146 = vector.broadcast %144 : vector<4x1xf32> to vector<4x64xf32>
    %147 = vector.broadcast %145 : vector<1x64xf32> to vector<4x64xf32>
    %148 = arith.mulf %146, %147 : vector<4x64xf32>
    %149 = arith.addf %125, %148 : vector<4x64xf32>
    %c0_47 = arith.constant 0 : index
    %c19 = arith.constant 19 : index
    %150 = vector.load %arg9[%c0_47, %c19] : memref<4x36xf32, #tpu.memory_space<vmem>>, vector<4x1xf32>
    %151 = vector.extract_strided_slice %1 {offsets = [3, 0], sizes = [1, 64], strides = [1, 1]} : vector<4x64xf32> to vector<1x64xf32>
    %152 = vector.broadcast %150 : vector<4x1xf32> to vector<4x64xf32>
    %153 = vector.broadcast %151 : vector<1x64xf32> to vector<4x64xf32>
    %154 = arith.mulf %152, %153 : vector<4x64xf32>
    %155 = arith.addf %131, %154 : vector<4x64xf32>
    %c0_48 = arith.constant 0 : index
    %c20 = arith.constant 20 : index
    %156 = vector.load %arg9[%c0_48, %c20] : memref<4x36xf32, #tpu.memory_space<vmem>>, vector<4x1xf32>
    %157 = vector.extract_strided_slice %3 {offsets = [0, 0], sizes = [1, 64], strides = [1, 1]} : vector<4x64xf32> to vector<1x64xf32>
    %158 = vector.broadcast %156 : vector<4x1xf32> to vector<4x64xf32>
    %159 = vector.broadcast %157 : vector<1x64xf32> to vector<4x64xf32>
    %160 = arith.mulf %158, %159 : vector<4x64xf32>
    %161 = arith.addf %137, %160 : vector<4x64xf32>
    %c0_49 = arith.constant 0 : index
    %c21 = arith.constant 21 : index
    %162 = vector.load %arg9[%c0_49, %c21] : memref<4x36xf32, #tpu.memory_space<vmem>>, vector<4x1xf32>
    %163 = vector.extract_strided_slice %3 {offsets = [1, 0], sizes = [1, 64], strides = [1, 1]} : vector<4x64xf32> to vector<1x64xf32>
    %164 = vector.broadcast %162 : vector<4x1xf32> to vector<4x64xf32>
    %165 = vector.broadcast %163 : vector<1x64xf32> to vector<4x64xf32>
    %166 = arith.mulf %164, %165 : vector<4x64xf32>
    %167 = arith.addf %143, %166 : vector<4x64xf32>
    %c0_50 = arith.constant 0 : index
    %c22 = arith.constant 22 : index
    %168 = vector.load %arg9[%c0_50, %c22] : memref<4x36xf32, #tpu.memory_space<vmem>>, vector<4x1xf32>
    %169 = vector.extract_strided_slice %3 {offsets = [2, 0], sizes = [1, 64], strides = [1, 1]} : vector<4x64xf32> to vector<1x64xf32>
    %170 = vector.broadcast %168 : vector<4x1xf32> to vector<4x64xf32>
    %171 = vector.broadcast %169 : vector<1x64xf32> to vector<4x64xf32>
    %172 = arith.mulf %170, %171 : vector<4x64xf32>
    %173 = arith.addf %149, %172 : vector<4x64xf32>
    %c0_51 = arith.constant 0 : index
    %c23 = arith.constant 23 : index
    %174 = vector.load %arg9[%c0_51, %c23] : memref<4x36xf32, #tpu.memory_space<vmem>>, vector<4x1xf32>
    %175 = vector.extract_strided_slice %3 {offsets = [3, 0], sizes = [1, 64], strides = [1, 1]} : vector<4x64xf32> to vector<1x64xf32>
    %176 = vector.broadcast %174 : vector<4x1xf32> to vector<4x64xf32>
    %177 = vector.broadcast %175 : vector<1x64xf32> to vector<4x64xf32>
    %178 = arith.mulf %176, %177 : vector<4x64xf32>
    %179 = arith.addf %155, %178 : vector<4x64xf32>
    %c0_52 = arith.constant 0 : index
    %c24 = arith.constant 24 : index
    %180 = vector.load %arg9[%c0_52, %c24] : memref<4x36xf32, #tpu.memory_space<vmem>>, vector<4x1xf32>
    %181 = vector.extract_strided_slice %31 {offsets = [0, 0], sizes = [1, 64], strides = [1, 1]} : vector<4x64xf32> to vector<1x64xf32>
    %182 = vector.broadcast %180 : vector<4x1xf32> to vector<4x64xf32>
    %183 = vector.broadcast %181 : vector<1x64xf32> to vector<4x64xf32>
    %184 = arith.mulf %182, %183 : vector<4x64xf32>
    %185 = arith.addf %161, %184 : vector<4x64xf32>
    %c0_53 = arith.constant 0 : index
    %c25 = arith.constant 25 : index
    %186 = vector.load %arg9[%c0_53, %c25] : memref<4x36xf32, #tpu.memory_space<vmem>>, vector<4x1xf32>
    %187 = vector.extract_strided_slice %31 {offsets = [1, 0], sizes = [1, 64], strides = [1, 1]} : vector<4x64xf32> to vector<1x64xf32>
    %188 = vector.broadcast %186 : vector<4x1xf32> to vector<4x64xf32>
    %189 = vector.broadcast %187 : vector<1x64xf32> to vector<4x64xf32>
    %190 = arith.mulf %188, %189 : vector<4x64xf32>
    %191 = arith.addf %167, %190 : vector<4x64xf32>
    %c0_54 = arith.constant 0 : index
    %c26 = arith.constant 26 : index
    %192 = vector.load %arg9[%c0_54, %c26] : memref<4x36xf32, #tpu.memory_space<vmem>>, vector<4x1xf32>
    %193 = vector.extract_strided_slice %31 {offsets = [2, 0], sizes = [1, 64], strides = [1, 1]} : vector<4x64xf32> to vector<1x64xf32>
    %194 = vector.broadcast %192 : vector<4x1xf32> to vector<4x64xf32>
    %195 = vector.broadcast %193 : vector<1x64xf32> to vector<4x64xf32>
    %196 = arith.mulf %194, %195 : vector<4x64xf32>
    %197 = arith.addf %173, %196 : vector<4x64xf32>
    %c0_55 = arith.constant 0 : index
    %c27 = arith.constant 27 : index
    %198 = vector.load %arg9[%c0_55, %c27] : memref<4x36xf32, #tpu.memory_space<vmem>>, vector<4x1xf32>
    %199 = vector.extract_strided_slice %31 {offsets = [3, 0], sizes = [1, 64], strides = [1, 1]} : vector<4x64xf32> to vector<1x64xf32>
    %200 = vector.broadcast %198 : vector<4x1xf32> to vector<4x64xf32>
    %201 = vector.broadcast %199 : vector<1x64xf32> to vector<4x64xf32>
    %202 = arith.mulf %200, %201 : vector<4x64xf32>
    %203 = arith.addf %179, %202 : vector<4x64xf32>
    %c0_56 = arith.constant 0 : index
    %c28 = arith.constant 28 : index
    %204 = vector.load %arg9[%c0_56, %c28] : memref<4x36xf32, #tpu.memory_space<vmem>>, vector<4x1xf32>
    %205 = vector.extract_strided_slice %5 {offsets = [0, 0], sizes = [1, 64], strides = [1, 1]} : vector<4x64xf32> to vector<1x64xf32>
    %206 = vector.broadcast %204 : vector<4x1xf32> to vector<4x64xf32>
    %207 = vector.broadcast %205 : vector<1x64xf32> to vector<4x64xf32>
    %208 = arith.mulf %206, %207 : vector<4x64xf32>
    %209 = arith.addf %185, %208 : vector<4x64xf32>
    %c0_57 = arith.constant 0 : index
    %c29 = arith.constant 29 : index
    %210 = vector.load %arg9[%c0_57, %c29] : memref<4x36xf32, #tpu.memory_space<vmem>>, vector<4x1xf32>
    %211 = vector.extract_strided_slice %5 {offsets = [1, 0], sizes = [1, 64], strides = [1, 1]} : vector<4x64xf32> to vector<1x64xf32>
    %212 = vector.broadcast %210 : vector<4x1xf32> to vector<4x64xf32>
    %213 = vector.broadcast %211 : vector<1x64xf32> to vector<4x64xf32>
    %214 = arith.mulf %212, %213 : vector<4x64xf32>
    %215 = arith.addf %191, %214 : vector<4x64xf32>
    %c0_58 = arith.constant 0 : index
    %c30 = arith.constant 30 : index
    %216 = vector.load %arg9[%c0_58, %c30] : memref<4x36xf32, #tpu.memory_space<vmem>>, vector<4x1xf32>
    %217 = vector.extract_strided_slice %5 {offsets = [2, 0], sizes = [1, 64], strides = [1, 1]} : vector<4x64xf32> to vector<1x64xf32>
    %218 = vector.broadcast %216 : vector<4x1xf32> to vector<4x64xf32>
    %219 = vector.broadcast %217 : vector<1x64xf32> to vector<4x64xf32>
    %220 = arith.mulf %218, %219 : vector<4x64xf32>
    %221 = arith.addf %197, %220 : vector<4x64xf32>
    %c0_59 = arith.constant 0 : index
    %c31 = arith.constant 31 : index
    %222 = vector.load %arg9[%c0_59, %c31] : memref<4x36xf32, #tpu.memory_space<vmem>>, vector<4x1xf32>
    %223 = vector.extract_strided_slice %5 {offsets = [3, 0], sizes = [1, 64], strides = [1, 1]} : vector<4x64xf32> to vector<1x64xf32>
    %224 = vector.broadcast %222 : vector<4x1xf32> to vector<4x64xf32>
    %225 = vector.broadcast %223 : vector<1x64xf32> to vector<4x64xf32>
    %226 = arith.mulf %224, %225 : vector<4x64xf32>
    %227 = arith.addf %203, %226 : vector<4x64xf32>
    %c0_60 = arith.constant 0 : index
    %c32 = arith.constant 32 : index
    %228 = vector.load %arg9[%c0_60, %c32] : memref<4x36xf32, #tpu.memory_space<vmem>>, vector<4x1xf32>
    %229 = vector.extract_strided_slice %7 {offsets = [0, 0], sizes = [1, 64], strides = [1, 1]} : vector<4x64xf32> to vector<1x64xf32>
    %230 = vector.broadcast %228 : vector<4x1xf32> to vector<4x64xf32>
    %231 = vector.broadcast %229 : vector<1x64xf32> to vector<4x64xf32>
    %232 = arith.mulf %230, %231 : vector<4x64xf32>
    %233 = arith.addf %209, %232 : vector<4x64xf32>
    %c0_61 = arith.constant 0 : index
    %c33 = arith.constant 33 : index
    %234 = vector.load %arg9[%c0_61, %c33] : memref<4x36xf32, #tpu.memory_space<vmem>>, vector<4x1xf32>
    %235 = vector.extract_strided_slice %7 {offsets = [1, 0], sizes = [1, 64], strides = [1, 1]} : vector<4x64xf32> to vector<1x64xf32>
    %236 = vector.broadcast %234 : vector<4x1xf32> to vector<4x64xf32>
    %237 = vector.broadcast %235 : vector<1x64xf32> to vector<4x64xf32>
    %238 = arith.mulf %236, %237 : vector<4x64xf32>
    %239 = arith.addf %215, %238 : vector<4x64xf32>
    %c0_62 = arith.constant 0 : index
    %c34 = arith.constant 34 : index
    %240 = vector.load %arg9[%c0_62, %c34] : memref<4x36xf32, #tpu.memory_space<vmem>>, vector<4x1xf32>
    %241 = vector.extract_strided_slice %7 {offsets = [2, 0], sizes = [1, 64], strides = [1, 1]} : vector<4x64xf32> to vector<1x64xf32>
    %242 = vector.broadcast %240 : vector<4x1xf32> to vector<4x64xf32>
    %243 = vector.broadcast %241 : vector<1x64xf32> to vector<4x64xf32>
    %244 = arith.mulf %242, %243 : vector<4x64xf32>
    %245 = arith.addf %221, %244 : vector<4x64xf32>
    %c0_63 = arith.constant 0 : index
    %c35 = arith.constant 35 : index
    %246 = vector.load %arg9[%c0_63, %c35] : memref<4x36xf32, #tpu.memory_space<vmem>>, vector<4x1xf32>
    %247 = vector.extract_strided_slice %7 {offsets = [3, 0], sizes = [1, 64], strides = [1, 1]} : vector<4x64xf32> to vector<1x64xf32>
    %248 = vector.broadcast %246 : vector<4x1xf32> to vector<4x64xf32>
    %249 = vector.broadcast %247 : vector<1x64xf32> to vector<4x64xf32>
    %250 = arith.mulf %248, %249 : vector<4x64xf32>
    %251 = arith.addf %227, %250 : vector<4x64xf32>
    %252 = arith.addf %233, %239 : vector<4x64xf32>
    %253 = arith.addf %245, %251 : vector<4x64xf32>
    %254 = arith.addf %252, %253 : vector<4x64xf32>
    %c0_64 = arith.constant 0 : index
    %c0_65 = arith.constant 0 : index
    %255 = vector.load %arg10[%c0_64, %c0_65] : memref<4x1xf32, #tpu.memory_space<vmem>>, vector<4x1xf32>
    %256 = vector.broadcast %255 : vector<4x1xf32> to vector<4x64xf32>
    %257 = arith.addf %254, %256 : vector<4x64xf32>
    %258 = arith.maximumf %1, %3 : vector<4x64xf32>
    %259 = arith.maximumf %5, %7 : vector<4x64xf32>
    %260 = arith.maximumf %258, %259 : vector<4x64xf32>
    %cst_66 = arith.constant 0.000000e+00 : f32
    %261 = vector.broadcast %cst_66 : f32 to vector<4x64xf32>
    %262 = arith.maximumf %257, %261 : vector<4x64xf32>
    %c0_67 = arith.constant 0 : index
    %c0_68 = arith.constant 0 : index
    %c0_69 = arith.constant 0 : index
    %263 = vector.load %arg11[%c0_67, %c0_68, %c0_69] : memref<1x8x64xf32, #tpu.memory_space<vmem>>, vector<1x4x64xf32>
    %264 = vector.shape_cast %263 : vector<1x4x64xf32> to vector<4x64xf32>
    %265 = vector.shape_cast %262 : vector<4x64xf32> to vector<1x4x64xf32>
    tpu.vector_store %arg11[%c0_67, %c0_68, %c0_69], %265 {strides = array<i32>} : memref<1x8x64xf32, #tpu.memory_space<vmem>>, vector<1x4x64xf32>,
    %cst_70 = arith.constant 0.000000e+00 : f32
    %266 = vector.broadcast %cst_70 : f32 to vector<4x64xf32>
    %267 = arith.maximumf %260, %266 : vector<4x64xf32>
    %c0_71 = arith.constant 0 : index
    %c4_72 = arith.constant 4 : index
    %c0_73 = arith.constant 0 : index
    %268 = vector.load %arg11[%c0_71, %c4_72, %c0_73] : memref<1x8x64xf32, #tpu.memory_space<vmem>>, vector<1x4x64xf32>
    %269 = vector.shape_cast %268 : vector<1x4x64xf32> to vector<4x64xf32>
    %270 = vector.shape_cast %267 : vector<4x64xf32> to vector<1x4x64xf32>
    tpu.vector_store %arg11[%c0_71, %c4_72, %c0_73], %270 {strides = array<i32>} : memref<1x8x64xf32, #tpu.memory_space<vmem>>, vector<1x4x64xf32>,
    return
  }
  func.func @transform_0(%arg0: i32, %arg1: i32) -> (i32, i32, i32) {
    %c0_i32 = arith.constant 0 : i32
    %c0_i32_0 = arith.constant 0 : i32
    return %arg0, %c0_i32, %arg1 : i32, i32, i32
  }
  func.func @transform_1(%arg0: i32, %arg1: i32) -> (i32, i32, i32) {
    %c0_i32 = arith.constant 0 : i32
    %c0_i32_0 = arith.constant 0 : i32
    return %arg0, %c0_i32, %arg1 : i32, i32, i32
  }
  func.func @transform_2(%arg0: i32, %arg1: i32) -> (i32, i32, i32) {
    %c0_i32 = arith.constant 0 : i32
    %c0_i32_0 = arith.constant 0 : i32
    return %arg0, %c0_i32, %arg1 : i32, i32, i32
  }
  func.func @transform_3(%arg0: i32, %arg1: i32) -> (i32, i32, i32) {
    %c0_i32 = arith.constant 0 : i32
    %c0_i32_0 = arith.constant 0 : i32
    return %arg0, %c0_i32, %arg1 : i32, i32, i32
  }
  func.func @transform_4(%arg0: i32, %arg1: i32) -> (i32, i32, i32, i32) {
    %c0_i32 = arith.constant 0 : i32
    %c0_i32_0 = arith.constant 0 : i32
    %c0_i32_1 = arith.constant 0 : i32
    return %arg0, %arg1, %c0_i32, %c0_i32_0 : i32, i32, i32, i32
  }
  func.func @transform_5(%arg0: i32, %arg1: i32) -> (i32, i32, i32, i32) {
    %c0_i32 = arith.constant 0 : i32
    %c0_i32_0 = arith.constant 0 : i32
    %c0_i32_1 = arith.constant 0 : i32
    return %arg0, %arg1, %c0_i32, %c0_i32_0 : i32, i32, i32, i32
  }
  func.func @transform_6(%arg0: i32, %arg1: i32) -> (i32, i32) {
    %c0_i32 = arith.constant 0 : i32
    %c0_i32_0 = arith.constant 0 : i32
    return %c0_i32, %arg1 : i32, i32
  }
  func.func @transform_7(%arg0: i32, %arg1: i32) -> (i32, i32) {
    %c0_i32 = arith.constant 0 : i32
    %c0_i32_0 = arith.constant 0 : i32
    %c0_i32_1 = arith.constant 0 : i32
    return %c0_i32, %c0_i32_0 : i32, i32
  }
  func.func @transform_8(%arg0: i32, %arg1: i32) -> (i32, i32) {
    %c0_i32 = arith.constant 0 : i32
    %c0_i32_0 = arith.constant 0 : i32
    %c0_i32_1 = arith.constant 0 : i32
    return %c0_i32, %c0_i32_0 : i32, i32
  }
  func.func @transform_9(%arg0: i32, %arg1: i32) -> (i32, i32, i32) {
    %c0_i32 = arith.constant 0 : i32
    %c0_i32_0 = arith.constant 0 : i32
    return %arg0, %c0_i32, %arg1 : i32, i32, i32
  }
}

</mosaic_0001>

<llo_original>
// kernel: tpu_custom_call.1
$region0: #{tpu_custom_call.1}
  #allocation0 [shape = 'u32[]', space=smem, size = 0x4, offset = 0x4, fixed_abs, tag = 'smem constant byte address 0x4 - core index']
  #allocation1 [shape = 'u32[72,128]{1,0:T(1,128)}', space=vmem, size = 0x9000, scoped, tag = 'internal scratch']
  %s0 = inlined_call_operand.hbm [shape: f32[2,4,64], index: 0, kind: input, shape index: {}]
  %s1 = inlined_call_operand.hbm [shape: f32[2,4,64], index: 1, kind: input, shape index: {}]
  %s2 = inlined_call_operand.hbm [shape: f32[2,4,64], index: 2, kind: input, shape index: {}]
  %s3 = inlined_call_operand.hbm [shape: f32[2,4,64], index: 3, kind: input, shape index: {}]
  %s4 = inlined_call_operand.hbm [shape: f32[2,1,4,8], index: 4, kind: input, shape index: {}]
  %s5 = inlined_call_operand.hbm [shape: f32[2,1,4,8], index: 5, kind: input, shape index: {}]
  %s6 = inlined_call_operand.vmem [shape: f32[1,64], index: 6, kind: input, shape index: {}]
  %s7 = inlined_call_operand.vmem [shape: f32[4,36], index: 7, kind: input, shape index: {}]
  %s8 = inlined_call_operand.vmem [shape: f32[4,1], index: 8, kind: input, shape index: {}]
  %s9 = inlined_call_operand.hbm [shape: f32[2,8,64], index: 9, kind: output, shape index: {}]
  %s10 = sld [smem:[#allocation0]]
  $region93: #{tpu_custom_call.1} parent=0
    _
  %s12 = ssub.s32 1, %s10
  %s13 = scalar_select 0, %s12, %s10
  $region1: #{tpu_custom_call.1} parent=0
    #allocation2 [shape = 'u8[4096]{0}', space=vmem, size = 0x1000, scoped, tag = 'input window, operand 0']
    #allocation3 [shape = 's32[2]{0}', space=sflag, size = 0x8, scoped, tag = 'scoped memory for tpu_custom_call.1']
    #allocation4 [shape = 's32[2]{0}', space=sflag, size = 0x8, scoped, tag = 'scoped memory for tpu_custom_call.1']
    #allocation5 [shape = 'u8[4096]{0}', space=vmem, size = 0x1000, scoped, tag = 'input window, operand 1']
    #allocation6 [shape = 's32[2]{0}', space=sflag, size = 0x8, scoped, tag = 'scoped memory for tpu_custom_call.1']
    #allocation7 [shape = 'u8[4096]{0}', space=vmem, size = 0x1000, scoped, tag = 'input window, operand 2']
    #allocation8 [shape = 'u8[4096]{0}', space=vmem, size = 0x1000, scoped, tag = 'input window, operand 3']
    #allocation9 [shape = 's32[2]{0}', space=sflag, size = 0x8, scoped, tag = 'scoped memory for tpu_custom_call.1']
    #allocation10 [shape = 'u8[4096]{0}', space=vmem, size = 0x1000, scoped, tag = 'input window, operand 4']
    #allocation11 [shape = 'u8[4096]{0}', space=vmem, size = 0x1000, scoped, tag = 'input window, operand 5']
    #allocation12 [shape = 's32[2]{0}', space=sflag, size = 0x8, scoped, tag = 'scoped memory for tpu_custom_call.1']
    #allocation13 [shape = 'u8[8192]{0}', space=vmem, size = 0x2000, scoped, tag = 'output window, operand 0']
    %14 = vsyncpa [#allocation3], 0
    %s15 = scalar_lea.sflag [#allocation3], 1
    %16 = vsyncpa %s15, 0
    %17 = vsyncpa [#allocation6], 0
    %s18 = scalar_lea.sflag [#allocation6], 1
    %19 = vsyncpa %s18, 0
    %20 = vsyncpa [#allocation9], 0
    %s21 = scalar_lea.sflag [#allocation9], 1
    %22 = vsyncpa %s21, 0
    %23 = vsyncpa [#allocation12], 0
    %s24 = scalar_lea.sflag [#allocation12], 1
    %25 = vsyncpa %s24, 0
    %26 = vsyncpa [#allocation4], 0
    %s27 = scalar_lea.sflag [#allocation4], 1
    %28 = vsyncpa %s27, 0
    loop: start=0, step=1, limit=4
    $region2: #{tpu_custom_call.1} parent=1 // loop_pre_header
      _
    $region3: #{tpu_custom_call.1} parent=1 // loop_header
      %s30 = sphi 0, %s34
      %p31 = scmp.ge.s32.totalorder %s30, 4
      %s37 = sphi 0, %s49
      %s38 = sphi 0, %s45
      %s39 = sphi 0, %s37
      %s40 = sphi 0, %s38
      %s41 = sphi 0, %s39
      %s42 = sphi 0, %s40
      %s54 = sphi 0, %s56
      %s57 = sphi 0, %s54
      %s58 = sphi 0, %s57
      %s74 = sphi 0, %s58
      %s82 = sphi 0, %s84
      %s85 = sphi 0, %s82
      %s86 = sphi 0, %s85
      %s102 = sphi 0, %s86
      %s110 = sphi 0, %s112
      %s113 = sphi 0, %s110
      %s114 = sphi 0, %s113
      %s130 = sphi 0, %s114
      %s138 = sphi 0, %s140
      %s141 = sphi 0, %s138
      %s142 = sphi 0, %s141
      %s158 = sphi 0, %s142
      %s166 = sphi 0, %s168
      %s169 = sphi 0, %s166
      %s170 = sphi 0, %s169
      %s186 = sphi 0, %s170
      %s194 = sphi 0, %s196
      %s197 = sphi 0, %s194
      %s198 = sphi 0, %s197
      %s214 = sphi 0, %s198
      %s220 = sphi 0, %s222
      %s223 = sphi 0, %s220
      %s224 = sphi 0, %s223
      %s240 = sphi 0, %s224
      %s244 = sphi 0, %s244
      %s246 = sphi 0, %s244
      %s247 = sphi 0, %s246
      %s261 = sphi 0, %s247
      %s265 = sphi 0, %s265
      %s267 = sphi 0, %s265
      %s268 = sphi 0, %s267
      %s282 = sphi 0, %s268
      %s290 = sphi 0, %s292
      %s293 = sphi 0, %s290
      %s294 = sphi 0, %s293
      %s310 = sphi 0, %s294
    $region4: #{tpu_custom_call.1} parent=1 // loop_header_branch
      %33 = sbr.rel (%p31) target = $region8
    $region5: #{tpu_custom_call.1} parent=1 // loop_body
      %s35 = ssub.s32 %s30, 1
      %s36 = ssub.s32 %s30, 2
      %s43 = sadd.s32 1, %s38
      %p44 = scmp.ge.s32.totalorder %s43, 1
      %s45 = scalar_select %p44, 0, %s43
      %s46 = sadd.s32 1, %s37
      %s47 = scalar_select %p44, %s46, %s37
      %p48 = scmp.ge.s32.totalorder %s47, 2
      %s49 = scalar_select %p48, 0, %s47
      %s50 = ssub.s32 %s37, %s49
      %s51 = ssub.s32 %s38, %s45
      %s52 = sor.u32 %s50, %s51
      %p53 = scmp.eq.s32.totalorder %s52, 0
      %s55 = sadd.s32 %s54, 1
      %s56 = scalar_select %p53, %s54, %s55
      %p59 = pneg %p53
      %p60 = scmp.eq.s32.totalorder %s30, 1
      %p61 = por %p59, %p60
      %p62 = scmp.ne.s32.totalorder %s54, %s57
      %p63 = scmp.eq.s32.totalorder %s30, 0
      %p64 = por %p62, %p63
      %p65 = scmp.ne.s32.totalorder %s54, %s57
      %p66 = scmp.eq.s32.totalorder %s35, 1
      %p67 = por %p65, %p66
      %p68 = scmp.ne.s32.totalorder %s57, %s58
      %p69 = scmp.eq.s32.totalorder %s35, 0
      %p70 = por %p68, %p69
      %p71 = scmp.ne.s32.totalorder %s57, %s58
      %p72 = scmp.eq.s32.totalorder %s36, 1
      %p73 = por %p71, %p72
      %p75 = scmp.ne.s32.totalorder %s58, %s74
      %p76 = scmp.eq.s32.totalorder %s36, 0
      %p77 = por %p75, %p76
      %s78 = ssub.s32 %s37, %s49
      %s79 = ssub.s32 %s38, %s45
      %s80 = sor.u32 %s78, %s79
      %p81 = scmp.eq.s32.totalorder %s80, 0
      %s83 = sadd.s32 %s82, 1
      %s84 = scalar_select %p81, %s82, %s83
      %p87 = pneg %p81
      %p88 = scmp.eq.s32.totalorder %s30, 1
      %p89 = por %p87, %p88
      %p90 = scmp.ne.s32.totalorder %s82, %s85
      %p91 = scmp.eq.s32.totalorder %s30, 0
      %p92 = por %p90, %p91
      %p93 = scmp.ne.s32.totalorder %s82, %s85
      %p94 = scmp.eq.s32.totalorder %s35, 1
      %p95 = por %p93, %p94
      %p96 = scmp.ne.s32.totalorder %s85, %s86
      %p97 = scmp.eq.s32.totalorder %s35, 0
      %p98 = por %p96, %p97
      %p99 = scmp.ne.s32.totalorder %s85, %s86
      %p100 = scmp.eq.s32.totalorder %s36, 1
      %p101 = por %p99, %p100
      %p103 = scmp.ne.s32.totalorder %s86, %s102
      %p104 = scmp.eq.s32.totalorder %s36, 0
      %p105 = por %p103, %p104
      %s106 = ssub.s32 %s37, %s49
      %s107 = ssub.s32 %s38, %s45
      %s108 = sor.u32 %s106, %s107
      %p109 = scmp.eq.s32.totalorder %s108, 0
      %s111 = sadd.s32 %s110, 1
      %s112 = scalar_select %p109, %s110, %s111
      %p115 = pneg %p109
      %p116 = scmp.eq.s32.totalorder %s30, 1
      %p117 = por %p115, %p116
      %p118 = scmp.ne.s32.totalorder %s110, %s113
      %p119 = scmp.eq.s32.totalorder %s30, 0
      %p120 = por %p118, %p119
      %p121 = scmp.ne.s32.totalorder %s110, %s113
      %p122 = scmp.eq.s32.totalorder %s35, 1
      %p123 = por %p121, %p122
      %p124 = scmp.ne.s32.totalorder %s113, %s114
      %p125 = scmp.eq.s32.totalorder %s35, 0
      %p126 = por %p124, %p125
      %p127 = scmp.ne.s32.totalorder %s113, %s114
      %p128 = scmp.eq.s32.totalorder %s36, 1
      %p129 = por %p127, %p128
      %p131 = scmp.ne.s32.totalorder %s114, %s130
      %p132 = scmp.eq.s32.totalorder %s36, 0
      %p133 = por %p131, %p132
      %s134 = ssub.s32 %s37, %s49
      %s135 = ssub.s32 %s38, %s45
      %s136 = sor.u32 %s134, %s135
      %p137 = scmp.eq.s32.totalorder %s136, 0
      %s139 = sadd.s32 %s138, 1
      %s140 = scalar_select %p137, %s138, %s139
      %p143 = pneg %p137
      %p144 = scmp.eq.s32.totalorder %s30, 1
      %p145 = por %p143, %p144
      %p146 = scmp.ne.s32.totalorder %s138, %s141
      %p147 = scmp.eq.s32.totalorder %s30, 0
      %p148 = por %p146, %p147
      %p149 = scmp.ne.s32.totalorder %s138, %s141
      %p150 = scmp.eq.s32.totalorder %s35, 1
      %p151 = por %p149, %p150
      %p152 = scmp.ne.s32.totalorder %s141, %s142
      %p153 = scmp.eq.s32.totalorder %s35, 0
      %p154 = por %p152, %p153
      %p155 = scmp.ne.s32.totalorder %s141, %s142
      %p156 = scmp.eq.s32.totalorder %s36, 1
      %p157 = por %p155, %p156
      %p159 = scmp.ne.s32.totalorder %s142, %s158
      %p160 = scmp.eq.s32.totalorder %s36, 0
      %p161 = por %p159, %p160
      %s162 = ssub.s32 %s37, %s49
      %s163 = ssub.s32 %s38, %s45
      %s164 = sor.u32 %s162, %s163
      %p165 = scmp.eq.s32.totalorder %s164, 0
      %s167 = sadd.s32 %s166, 1
      %s168 = scalar_select %p165, %s166, %s167
      %p171 = pneg %p165
      %p172 = scmp.eq.s32.totalorder %s30, 1
      %p173 = por %p171, %p172
      %p174 = scmp.ne.s32.totalorder %s166, %s169
      %p175 = scmp.eq.s32.totalorder %s30, 0
      %p176 = por %p174, %p175
      %p177 = scmp.ne.s32.totalorder %s166, %s169
      %p178 = scmp.eq.s32.totalorder %s35, 1
      %p179 = por %p177, %p178
      %p180 = scmp.ne.s32.totalorder %s169, %s170
      %p181 = scmp.eq.s32.totalorder %s35, 0
      %p182 = por %p180, %p181
      %p183 = scmp.ne.s32.totalorder %s169, %s170
      %p184 = scmp.eq.s32.totalorder %s36, 1
      %p185 = por %p183, %p184
      %p187 = scmp.ne.s32.totalorder %s170, %s186
      %p188 = scmp.eq.s32.totalorder %s36, 0
      %p189 = por %p187, %p188
      %s190 = ssub.s32 %s37, %s49
      %s191 = ssub.s32 %s38, %s45
      %s192 = sor.u32 %s190, %s191
      %p193 = scmp.eq.s32.totalorder %s192, 0
      %s195 = sadd.s32 %s194, 1
      %s196 = scalar_select %p193, %s194, %s195
      %p199 = pneg %p193
      %p200 = scmp.eq.s32.totalorder %s30, 1
      %p201 = por %p199, %p200
      %p202 = scmp.ne.s32.totalorder %s194, %s197
      %p203 = scmp.eq.s32.totalorder %s30, 0
      %p204 = por %p202, %p203
      %p205 = scmp.ne.s32.totalorder %s194, %s197
      %p206 = scmp.eq.s32.totalorder %s35, 1
      %p207 = por %p205, %p206
      %p208 = scmp.ne.s32.totalorder %s197, %s198
      %p209 = scmp.eq.s32.totalorder %s35, 0
      %p210 = por %p208, %p209
      %p211 = scmp.ne.s32.totalorder %s197, %s198
      %p212 = scmp.eq.s32.totalorder %s36, 1
      %p213 = por %p211, %p212
      %p215 = scmp.ne.s32.totalorder %s198, %s214
      %p216 = scmp.eq.s32.totalorder %s36, 0
      %p217 = por %p215, %p216
      %s218 = ssub.s32 %s38, %s45
      %p219 = scmp.eq.s32.totalorder %s218, 0
      %s221 = sadd.s32 %s220, 1
      %s222 = scalar_select %p219, %s220, %s221
      %p225 = pneg %p219
      %p226 = scmp.eq.s32.totalorder %s30, 1
      %p227 = por %p225, %p226
      %p228 = scmp.ne.s32.totalorder %s220, %s223
      %p229 = scmp.eq.s32.totalorder %s30, 0
      %p230 = por %p228, %p229
      %p231 = scmp.ne.s32.totalorder %s220, %s223
      %p232 = scmp.eq.s32.totalorder %s35, 1
      %p233 = por %p231, %p232
      %p234 = scmp.ne.s32.totalorder %s223, %s224
      %p235 = scmp.eq.s32.totalorder %s35, 0
      %p236 = por %p234, %p235
      %p237 = scmp.ne.s32.totalorder %s223, %s224
      %p238 = scmp.eq.s32.totalorder %s36, 1
      %p239 = por %p237, %p238
      %p241 = scmp.ne.s32.totalorder %s224, %s240
      %p242 = scmp.eq.s32.totalorder %s36, 0
      %p243 = por %p241, %p242
      %s245 = sadd.s32 %s244, 1
      %p248 = scmp.eq.s32.totalorder %s30, 1
      %p249 = scmp.ne.s32.totalorder %s244, %s246
      %p250 = scmp.eq.s32.totalorder %s30, 0
      %p251 = por %p249, %p250
      %p252 = scmp.ne.s32.totalorder %s244, %s246
      %p253 = scmp.eq.s32.totalorder %s35, 1
      %p254 = por %p252, %p253
      %p255 = scmp.ne.s32.totalorder %s246, %s247
      %p256 = scmp.eq.s32.totalorder %s35, 0
      %p257 = por %p255, %p256
      %p258 = scmp.ne.s32.totalorder %s246, %s247
      %p259 = scmp.eq.s32.totalorder %s36, 1
      %p260 = por %p258, %p259
      %p262 = scmp.ne.s32.totalorder %s247, %s261
      %p263 = scmp.eq.s32.totalorder %s36, 0
      %p264 = por %p262, %p263
      %s266 = sadd.s32 %s265, 1
      %p269 = scmp.eq.s32.totalorder %s30, 1
      %p270 = scmp.ne.s32.totalorder %s265, %s267
      %p271 = scmp.eq.s32.totalorder %s30, 0
      %p272 = por %p270, %p271
      %p273 = scmp.ne.s32.totalorder %s265, %s267
      %p274 = scmp.eq.s32.totalorder %s35, 1
      %p275 = por %p273, %p274
      %p276 = scmp.ne.s32.totalorder %s267, %s268
      %p277 = scmp.eq.s32.totalorder %s35, 0
      %p278 = por %p276, %p277
      %p279 = scmp.ne.s32.totalorder %s267, %s268
      %p280 = scmp.eq.s32.totalorder %s36, 1
      %p281 = por %p279, %p280
      %p283 = scmp.ne.s32.totalorder %s268, %s282
      %p284 = scmp.eq.s32.totalorder %s36, 0
      %p285 = por %p283, %p284
      %s286 = ssub.s32 %s37, %s49
      %s287 = ssub.s32 %s38, %s45
      %s288 = sor.u32 %s286, %s287
      %p289 = scmp.eq.s32.totalorder %s288, 0
      %s291 = sadd.s32 %s290, 1
      %s292 = scalar_select %p289, %s290, %s291
      %p295 = pneg %p289
      %p296 = scmp.eq.s32.totalorder %s30, 1
      %p297 = por %p295, %p296
      %p298 = scmp.ne.s32.totalorder %s290, %s293
      %p299 = scmp.eq.s32.totalorder %s30, 0
      %p300 = por %p298, %p299
      %p301 = scmp.ne.s32.totalorder %s290, %s293
      %p302 = scmp.eq.s32.totalorder %s35, 1
      %p303 = por %p301, %p302
      %p304 = scmp.ne.s32.totalorder %s293, %s294
      %p305 = scmp.eq.s32.totalorder %s35, 0
      %p306 = por %p304, %p305
      %p307 = scmp.ne.s32.totalorder %s293, %s294
      %p308 = scmp.eq.s32.totalorder %s36, 1
      %p309 = por %p307, %p308
      %p311 = scmp.ne.s32.totalorder %s294, %s310
      %p312 = scmp.eq.s32.totalorder %s36, 0
      %p313 = por %p311, %p312
      %p314 = scmp.le.s32.totalorder 1, %s30
      %p315 = scmp.lt.s32.totalorder %s30, 3
      %p316 = pnand %p314, %p315
      %p317 = pneg %p316
      // Predicated region
      $region9: #{tpu_custom_call.1} parent=5 // pred_check
        _
      $region10: #{tpu_custom_call.1} parent=5 // pred_check_branch
        %319 = sbr.rel (%p316) target = $region12
      $region11: #{tpu_custom_call.1} parent=5 // pred_region
        %s320 = ssub.s32 %s30, 1
        // Predicated region
        $region13: #{tpu_custom_call.1} parent=11 // pred_check
          %p321 = pneg %p236
        $region14: #{tpu_custom_call.1} parent=11 // pred_check_branch
          %323 = sbr.rel (%p321) target = $region16
        $region15: #{tpu_custom_call.1} parent=11 // pred_region
          %p324 = scmp.lt.s32.totalorder %s40, 0
          %s325 = scalar_select %p324, %s40, 0
          %s326 = scalar_lea.vmem %s6, %s325
        $region16: #{tpu_custom_call.1} parent=11 // pred_fallthru
          _
        // Predicated region
        $region17: #{tpu_custom_call.1} parent=11 // pred_check
          %p327 = pneg %p257
        $region18: #{tpu_custom_call.1} parent=11 // pred_check_branch
          %329 = sbr.rel (%p327) target = $region20
        $region19: #{tpu_custom_call.1} parent=11 // pred_region
          _
        $region20: #{tpu_custom_call.1} parent=11 // pred_fallthru
          _
        // Predicated region
        $region21: #{tpu_custom_call.1} parent=11 // pred_check
          %p330 = pneg %p278
        $region22: #{tpu_custom_call.1} parent=11 // pred_check_branch
          %332 = sbr.rel (%p330) target = $region24
        $region23: #{tpu_custom_call.1} parent=11 // pred_region
          _
        $region24: #{tpu_custom_call.1} parent=11 // pred_fallthru
          _
      $region12: #{tpu_custom_call.1} parent=5 // pred_fallthru
        _
      %p333 = scmp.lt.s32.totalorder %s30, 2
      // Predicated region
      $region25: #{tpu_custom_call.1} parent=5 // pred_check
        %p334 = pneg %p333
      $region26: #{tpu_custom_call.1} parent=5 // pred_check_branch
        %336 = sbr.rel (%p334) target = $region28
      $region27: #{tpu_custom_call.1} parent=5 // pred_region
        // Predicated region
        $region29: #{tpu_custom_call.1} parent=27 // pred_check
          %p337 = pneg %p64
        $region30: #{tpu_custom_call.1} parent=27 // pred_check_branch
          %339 = sbr.rel (%p337) target = $region32
        $region31: #{tpu_custom_call.1} parent=27 // pred_region
          %s340 = sand.u32 %s54, 1
          %s341 = scalar_lea.sflag [#allocation3], %s340
          %s342 = sand.u32 %s54, 1
          %s343 = smul.addr %s342, 4
          %s344 = scalar_lea.vmem [#allocation2], %s343
          %346 = vsyncadd %s341, 0
          %s347 = sadd.s32 %s38, %s37
          %s348 = smul.addr %s347, 4
          %s349 = scalar_lea.hbm %s0, %s348
          %s351 = sshll.u32 %s349, 4
          %s352 = int_to_ptr.hbm [resolvable:$true] %s351
          %s353 = sshll.u32 %s344, 4
          %s354 = int_to_ptr.vmem [resolvable:$true] %s353
          %356 = dma.hbm_to_vmem [thread:$0]  %s352, 64, %s354, %s341
        $region32: #{tpu_custom_call.1} parent=27 // pred_fallthru
          _
        // Predicated region
        $region33: #{tpu_custom_call.1} parent=27 // pred_check
          %p357 = pneg %p92
        $region34: #{tpu_custom_call.1} parent=27 // pred_check_branch
          %359 = sbr.rel (%p357) target = $region36
        $region35: #{tpu_custom_call.1} parent=27 // pred_region
          %s360 = sand.u32 %s30, 1
          %s361 = scalar_lea.sflag [#allocation6], %s360
          %s362 = sand.u32 %s82, 1
          %s363 = smul.addr %s362, 4
          %s364 = scalar_lea.vmem [#allocation5], %s363
          %366 = vsyncadd %s361, 0
          %s367 = sadd.s32 %s38, %s37
          %s368 = smul.addr %s367, 4
          %s369 = scalar_lea.hbm %s1, %s368
          %s371 = sshll.u32 %s369, 4
          %s372 = int_to_ptr.hbm [resolvable:$true] %s371
          %s373 = sshll.u32 %s364, 4
          %s374 = int_to_ptr.vmem [resolvable:$true] %s373
          %376 = dma.hbm_to_vmem [thread:$0]  %s372, 64, %s374, %s361
        $region36: #{tpu_custom_call.1} parent=27 // pred_fallthru
          _
        // Predicated region
        $region37: #{tpu_custom_call.1} parent=27 // pred_check
          %p377 = pneg %p120
        $region38: #{tpu_custom_call.1} parent=27 // pred_check_branch
          %379 = sbr.rel (%p377) target = $region40
        $region39: #{tpu_custom_call.1} parent=27 // pred_region
          %s380 = sand.u32 %s30, 1
          %s381 = scalar_lea.sflag [#allocation6], %s380
          %s382 = sand.u32 %s110, 1
          %s383 = smul.addr %s382, 4
          %s384 = scalar_lea.vmem [#allocation7], %s383
          %386 = vsyncadd %s381, 0
          %s387 = sadd.s32 %s38, %s37
          %s388 = smul.addr %s387, 4
          %s389 = scalar_lea.hbm %s2, %s388
          %s391 = sshll.u32 %s389, 4
          %s392 = int_to_ptr.hbm [resolvable:$true] %s391
          %s393 = sshll.u32 %s384, 4
          %s394 = int_to_ptr.vmem [resolvable:$true] %s393
          %396 = dma.hbm_to_vmem [thread:$0]  %s392, 64, %s394, %s381
        $region40: #{tpu_custom_call.1} parent=27 // pred_fallthru
          _
        // Predicated region
        $region41: #{tpu_custom_call.1} parent=27 // pred_check
          %p397 = pneg %p148
        $region42: #{tpu_custom_call.1} parent=27 // pred_check_branch
          %399 = sbr.rel (%p397) target = $region44
        $region43: #{tpu_custom_call.1} parent=27 // pred_region
          %s400 = sand.u32 %s30, 1
          %s401 = scalar_lea.sflag [#allocation9], %s400
          %s402 = sand.u32 %s138, 1
          %s403 = smul.addr %s402, 4
          %s404 = scalar_lea.vmem [#allocation8], %s403
          %406 = vsyncadd %s401, 0
          %s407 = sadd.s32 %s38, %s37
          %s408 = smul.addr %s407, 4
          %s409 = scalar_lea.hbm %s3, %s408
          %s411 = sshll.u32 %s409, 4
          %s412 = int_to_ptr.hbm [resolvable:$true] %s411
          %s413 = sshll.u32 %s404, 4
          %s414 = int_to_ptr.vmem [resolvable:$true] %s413
          %416 = dma.hbm_to_vmem [thread:$0]  %s412, 64, %s414, %s401
        $region44: #{tpu_custom_call.1} parent=27 // pred_fallthru
          _
        // Predicated region
        $region45: #{tpu_custom_call.1} parent=27 // pred_check
          %p417 = pneg %p176
        $region46: #{tpu_custom_call.1} parent=27 // pred_check_branch
          %419 = sbr.rel (%p417) target = $region48
        $region47: #{tpu_custom_call.1} parent=27 // pred_region
          %s420 = sand.u32 %s30, 1
          %s421 = scalar_lea.sflag [#allocation9], %s420
          %s422 = sand.u32 %s166, 1
          %s423 = smul.addr %s422, 4
          %s424 = scalar_lea.vmem [#allocation10], %s423
          %426 = vsyncadd %s421, 0
          %s427 = sadd.s32 %s38, %s37
          %s428 = smul.addr %s427, 4
          %s429 = scalar_lea.hbm %s4, %s428
          %s431 = sshll.u32 %s429, 4
          %s432 = int_to_ptr.hbm [resolvable:$true] %s431
          %s433 = sshll.u32 %s424, 4
          %s434 = int_to_ptr.vmem [resolvable:$true] %s433
          %436 = dma.hbm_to_vmem [thread:$0]  %s432, 64, %s434, %s421
        $region48: #{tpu_custom_call.1} parent=27 // pred_fallthru
          _
        // Predicated region
        $region49: #{tpu_custom_call.1} parent=27 // pred_check
          %p437 = pneg %p204
        $region50: #{tpu_custom_call.1} parent=27 // pred_check_branch
          %439 = sbr.rel (%p437) target = $region52
        $region51: #{tpu_custom_call.1} parent=27 // pred_region
          %s440 = sand.u32 %s194, 1
          %s441 = scalar_lea.sflag [#allocation12], %s440
          %s442 = sand.u32 %s194, 1
          %s443 = smul.addr %s442, 4
          %s444 = scalar_lea.vmem [#allocation11], %s443
          %446 = vsyncadd %s441, 0
          %s447 = sadd.s32 %s38, %s37
          %s448 = smul.addr %s447, 4
          %s449 = scalar_lea.hbm %s5, %s448
          %s451 = sshll.u32 %s449, 4
          %s452 = int_to_ptr.hbm [resolvable:$true] %s451
          %s453 = sshll.u32 %s444, 4
          %s454 = int_to_ptr.vmem [resolvable:$true] %s453
          %456 = dma.hbm_to_vmem [thread:$0]  %s452, 64, %s454, %s441
        $region52: #{tpu_custom_call.1} parent=27 // pred_fallthru
          _
      $region28: #{tpu_custom_call.1} parent=5 // pred_fallthru
        _
      %p457 = scmp.le.s32.totalorder 1, %s30
      %p458 = scmp.lt.s32.totalorder %s30, 3
      %p459 = pnand %p457, %p458
      %p460 = pneg %p459
      // Predicated region
      $region53: #{tpu_custom_call.1} parent=5 // pred_check
        _
      $region54: #{tpu_custom_call.1} parent=5 // pred_check_branch
        %462 = sbr.rel (%p459) target = $region56
      $region55: #{tpu_custom_call.1} parent=5 // pred_region
        %s463 = ssub.s32 %s30, 1
        %s464 = sand.u32 %s57, 1
        %s465 = scalar_lea.sflag [#allocation3], %s464
        %s466 = sand.u32 %s57, 1
        %s467 = smul.addr %s466, 4
        %s468 = scalar_lea.vmem [#allocation2], %s467
        // Predicated region
        $region57: #{tpu_custom_call.1} parent=55 // pred_check
          %p469 = pneg %p70
        $region58: #{tpu_custom_call.1} parent=55 // pred_check_branch
          %471 = sbr.rel (%p469) target = $region60
        $region59: #{tpu_custom_call.1} parent=55 // pred_region
          %473 = dma.done %s465, 64
        $region60: #{tpu_custom_call.1} parent=55 // pred_fallthru
          _
        %s474 = sand.u32 %s35, 1
        %s475 = scalar_lea.sflag [#allocation6], %s474
        %s476 = sand.u32 %s85, 1
        %s477 = smul.addr %s476, 4
        %s478 = scalar_lea.vmem [#allocation5], %s477
        // Predicated region
        $region61: #{tpu_custom_call.1} parent=55 // pred_check
          %p479 = pneg %p98
        $region62: #{tpu_custom_call.1} parent=55 // pred_check_branch
          %481 = sbr.rel (%p479) target = $region64
        $region63: #{tpu_custom_call.1} parent=55 // pred_region
          %483 = dma.done %s475, 64
        $region64: #{tpu_custom_call.1} parent=55 // pred_fallthru
          _
        %s484 = sand.u32 %s35, 1
        %s485 = scalar_lea.sflag [#allocation6], %s484
        %s486 = sand.u32 %s113, 1
        %s487 = smul.addr %s486, 4
        %s488 = scalar_lea.vmem [#allocation7], %s487
        // Predicated region
        $region65: #{tpu_custom_call.1} parent=55 // pred_check
          %p489 = pneg %p126
        $region66: #{tpu_custom_call.1} parent=55 // pred_check_branch
          %491 = sbr.rel (%p489) target = $region68
        $region67: #{tpu_custom_call.1} parent=55 // pred_region
          %493 = dma.done %s485, 64
        $region68: #{tpu_custom_call.1} parent=55 // pred_fallthru
          _
        %s494 = sand.u32 %s35, 1
        %s495 = scalar_lea.sflag [#allocation9], %s494
        %s496 = sand.u32 %s141, 1
        %s497 = smul.addr %s496, 4
        %s498 = scalar_lea.vmem [#allocation8], %s497
        // Predicated region
        $region69: #{tpu_custom_call.1} parent=55 // pred_check
          %p499 = pneg %p154
        $region70: #{tpu_custom_call.1} parent=55 // pred_check_branch
          %501 = sbr.rel (%p499) target = $region72
        $region71: #{tpu_custom_call.1} parent=55 // pred_region
          %503 = dma.done %s495, 64
        $region72: #{tpu_custom_call.1} parent=55 // pred_fallthru
          _
        %s504 = sand.u32 %s35, 1
        %s505 = scalar_lea.sflag [#allocation9], %s504
        %s506 = sand.u32 %s169, 1
        %s507 = smul.addr %s506, 4
        %s508 = scalar_lea.vmem [#allocation10], %s507
        // Predicated region
        $region73: #{tpu_custom_call.1} parent=55 // pred_check
          %p509 = pneg %p182
        $region74: #{tpu_custom_call.1} parent=55 // pred_check_branch
          %511 = sbr.rel (%p509) target = $region76
        $region75: #{tpu_custom_call.1} parent=55 // pred_region
          %513 = dma.done %s505, 64
        $region76: #{tpu_custom_call.1} parent=55 // pred_fallthru
          _
        %s514 = sand.u32 %s197, 1
        %s515 = scalar_lea.sflag [#allocation12], %s514
        %s516 = sand.u32 %s197, 1
        %s517 = smul.addr %s516, 4
        %s518 = scalar_lea.vmem [#allocation11], %s517
        // Predicated region
        $region77: #{tpu_custom_call.1} parent=55 // pred_check
          %p519 = pneg %p210
        $region78: #{tpu_custom_call.1} parent=55 // pred_check_branch
          %521 = sbr.rel (%p519) target = $region80
        $region79: #{tpu_custom_call.1} parent=55 // pred_region
          %523 = dma.done %s515, 64
        $region80: #{tpu_custom_call.1} parent=55 // pred_fallthru
          _
        %s524 = sand.u32 %s57, 1
        %s525 = scalar_lea.sflag [#allocation3], %s524
        %s526 = sand.u32 %s57, 1
        %s527 = smul.addr %s526, 4
        %s528 = scalar_lea.vmem [#allocation2], %s527
        %p529 = pneg %p70
        %p530 = pneg %p67
        %s531 = sand.u32 %s35, 1
        %s532 = scalar_lea.sflag [#allocation6], %s531
        %s533 = sand.u32 %s85, 1
        %s534 = smul.addr %s533, 4
        %s535 = scalar_lea.vmem [#allocation5], %s534
        %p536 = pneg %p98
        %p537 = pneg %p95
        %s538 = sand.u32 %s35, 1
        %s539 = scalar_lea.sflag [#allocation6], %s538
        %s540 = sand.u32 %s113, 1
        %s541 = smul.addr %s540, 4
        %s542 = scalar_lea.vmem [#allocation7], %s541
        %p543 = pneg %p126
        %p544 = pneg %p123
        %s545 = sand.u32 %s35, 1
        %s546 = scalar_lea.sflag [#allocation9], %s545
        %s547 = sand.u32 %s141, 1
        %s548 = smul.addr %s547, 4
        %s549 = scalar_lea.vmem [#allocation8], %s548
        %p550 = pneg %p154
        %p551 = pneg %p151
        %s552 = sand.u32 %s35, 1
        %s553 = scalar_lea.sflag [#allocation9], %s552
        %s554 = sand.u32 %s169, 1
        %s555 = smul.addr %s554, 4
        %s556 = scalar_lea.vmem [#allocation10], %s555
        %p557 = pneg %p182
        %p558 = pneg %p179
        %s559 = sand.u32 %s197, 1
        %s560 = scalar_lea.sflag [#allocation12], %s559
        %s561 = sand.u32 %s197, 1
        %s562 = smul.addr %s561, 4
        %s563 = scalar_lea.vmem [#allocation11], %s562
        %p564 = pneg %p210
        %p565 = pneg %p207
        %p566 = scmp.lt.s32.totalorder %s40, 0
        %s567 = scalar_select %p566, %s40, 0
        %s568 = scalar_lea.vmem %s6, %s567
        %p569 = pneg %p236
        %p570 = pneg %p233
        %p571 = pneg %p257
        %p572 = pneg %p254
        %p573 = pneg %p278
        %p574 = pneg %p275
        %p575 = pneg %p306
        %p576 = pneg %p303
        %s577 = sand.u32 %s293, 1
        %s578 = scalar_lea.sflag [#allocation4], %s577
        %s579 = sand.u32 %s293, 1
        %s580 = smul.addr %s579, 8
        %s581 = scalar_lea.vmem [#allocation13], %s580
        %p582 = scmp.lt.s32.totalorder %s40, 0
        %s583 = scalar_select %p582, %s40, 0
        %s584 = scalar_lea.vmem %s6, %s583
        %v585 = vld [vmem:[%s468] sm:$0xf]
        %v586 = vld [vmem:[%s478] sm:$0xf]
        %v587 = vld [vmem:[%s488] sm:$0xf]
        %v588 = vld [vmem:[%s498] sm:$0xf]
        %v589 = vld [vmem:[%s508] sm:$0xf]
        %v590 = vld [vmem:[%s518] sm:$0xf]
        %v591 = vld [vmem:[%s584] sm:$0x1]
        %593 = vrot.lane.b32.xlu0 %v587, 8
        %v594 = vpop.permute.xlu0 %593
        %vm596 = vcmask 64512
        %v597 = vsel %vm596, %v589, %v594
        %599 = vrot.lane.b32.xlu0 %v588, 8
        %v600 = vpop.permute.xlu0 %599
        %v602 = vsel %vm596, %v590, %v600
        %604 = vrot.lane.b32.xlu0 %v602, 1
        %v605 = vpop.permute.xlu0 %604
        %vm607 = vcmask 7168
        %v608 = vsel %vm607, 0.0, %v605
        %v610 = vperm.slane %v591, 0
        %v612 = vmul.f32 %v608, %v610
        %614 = vrot.lane.b32.xlu0 %v586, 1
        %v615 = vpop.permute.xlu0 %614
        %v617 = vsel %vm607, 0.0, %v615
        %v618 = vmul.f32 %v617, %v610
        %619 = vrot.lane.b32.xlu0 %v588, 1
        %v620 = vpop.permute.xlu0 %619
        %v622 = vsel %vm607, 0.0, %v620
        %v623 = vmul.f32 %v622, %v610
        %v624 = vld [vmem:[%s7] sm:$0xf]
        %626 = vset.pattern.permute.xlu0 0
        %627 = vperm.xlu0 %626, %v624
        %v628 = vpop.permute.xlu0 %627
        %v630 = vperm.slane %v612, 0
        %v631 = vmul.f32 %v628, %v630
        %v632 = vadd.f32 %v631, 0.0
        %633 = vset.pattern.permute.xlu0 1
        %634 = vperm.xlu0 %633, %v624
        %v635 = vpop.permute.xlu0 %634
        %v637 = vperm.slane %v612, 1
        %v638 = vmul.f32 %v635, %v637
        %v639 = vadd.f32 %v638, 0.0
        %640 = vset.pattern.permute.xlu0 2
        %641 = vperm.xlu0 %640, %v624
        %v642 = vpop.permute.xlu0 %641
        %v644 = vperm.slane %v612, 2
        %v645 = vmul.f32 %v642, %v644
        %v646 = vadd.f32 %v645, 0.0
        %647 = vset.pattern.permute.xlu0 3
        %648 = vperm.xlu0 %647, %v624
        %v649 = vpop.permute.xlu0 %648
        %v651 = vperm.slane %v612, 3
        %v652 = vmul.f32 %v649, %v651
        %v653 = vadd.f32 %v652, 0.0
        %654 = vset.pattern.permute.xlu0 4
        %655 = vperm.xlu0 %654, %v624
        %v656 = vpop.permute.xlu0 %655
        %v658 = vperm.slane %v597, 0
        %v659 = vmul.f32 %v656, %v658
        %v660 = vadd.f32 %v632, %v659
        %661 = vset.pattern.permute.xlu0 5
        %662 = vperm.xlu0 %661, %v624
        %v663 = vpop.permute.xlu0 %662
        %v665 = vperm.slane %v597, 1
        %v666 = vmul.f32 %v663, %v665
        %v667 = vadd.f32 %v639, %v666
        %668 = vset.pattern.permute.xlu0 6
        %669 = vperm.xlu0 %668, %v624
        %v670 = vpop.permute.xlu0 %669
        %v672 = vperm.slane %v597, 2
        %v673 = vmul.f32 %v670, %v672
        %v674 = vadd.f32 %v646, %v673
        %675 = vset.pattern.permute.xlu0 7
        %676 = vperm.xlu0 %675, %v624
        %v677 = vpop.permute.xlu0 %676
        %v679 = vperm.slane %v597, 3
        %v680 = vmul.f32 %v677, %v679
        %v681 = vadd.f32 %v653, %v680
        %682 = vset.pattern.permute.xlu0 8
        %683 = vperm.xlu0 %682, %v624
        %v684 = vpop.permute.xlu0 %683
        %v686 = vperm.slane %v602, 0
        %v687 = vmul.f32 %v684, %v686
        %v688 = vadd.f32 %v660, %v687
        %689 = vset.pattern.permute.xlu0 9
        %690 = vperm.xlu0 %689, %v624
        %v691 = vpop.permute.xlu0 %690
        %v693 = vperm.slane %v602, 1
        %v694 = vmul.f32 %v691, %v693
        %v695 = vadd.f32 %v667, %v694
        %696 = vset.pattern.permute.xlu0 10
        %697 = vperm.xlu0 %696, %v624
        %v698 = vpop.permute.xlu0 %697
        %v700 = vperm.slane %v602, 2
        %v701 = vmul.f32 %v698, %v700
        %v702 = vadd.f32 %v674, %v701
        %703 = vset.pattern.permute.xlu0 11
        %704 = vperm.xlu0 %703, %v624
        %v705 = vpop.permute.xlu0 %704
        %v707 = vperm.slane %v602, 3
        %v708 = vmul.f32 %v705, %v707
        %v709 = vadd.f32 %v681, %v708
        %710 = vset.pattern.permute.xlu0 12
        %711 = vperm.xlu0 %710, %v624
        %v712 = vpop.permute.xlu0 %711
        %v714 = vperm.slane %v618, 0
        %v715 = vmul.f32 %v712, %v714
        %v716 = vadd.f32 %v688, %v715
        %717 = vset.pattern.permute.xlu0 13
        %718 = vperm.xlu0 %717, %v624
        %v719 = vpop.permute.xlu0 %718
        %v721 = vperm.slane %v618, 1
        %v722 = vmul.f32 %v719, %v721
        %v723 = vadd.f32 %v695, %v722
        %724 = vset.pattern.permute.xlu0 14
        %725 = vperm.xlu0 %724, %v624
        %v726 = vpop.permute.xlu0 %725
        %v728 = vperm.slane %v618, 2
        %v729 = vmul.f32 %v726, %v728
        %v730 = vadd.f32 %v702, %v729
        %731 = vset.pattern.permute.xlu0 15
        %732 = vperm.xlu0 %731, %v624
        %v733 = vpop.permute.xlu0 %732
        %v735 = vperm.slane %v618, 3
        %v736 = vmul.f32 %v733, %v735
        %v737 = vadd.f32 %v709, %v736
        %738 = vset.pattern.permute.xlu0 16
        %739 = vperm.xlu0 %738, %v624
        %v740 = vpop.permute.xlu0 %739
        %v742 = vperm.slane %v585, 0
        %v743 = vmul.f32 %v740, %v742
        %v744 = vadd.f32 %v716, %v743
        %745 = vset.pattern.permute.xlu0 17
        %746 = vperm.xlu0 %745, %v624
        %v747 = vpop.permute.xlu0 %746
        %v749 = vperm.slane %v585, 1
        %v750 = vmul.f32 %v747, %v749
        %v751 = vadd.f32 %v723, %v750
        %752 = vset.pattern.permute.xlu0 18
        %753 = vperm.xlu0 %752, %v624
        %v754 = vpop.permute.xlu0 %753
        %v756 = vperm.slane %v585, 2
        %v757 = vmul.f32 %v754, %v756
        %v758 = vadd.f32 %v730, %v757
        %759 = vset.pattern.permute.xlu0 19
        %760 = vperm.xlu0 %759, %v624
        %v761 = vpop.permute.xlu0 %760
        %v763 = vperm.slane %v585, 3
        %v764 = vmul.f32 %v761, %v763
        %v765 = vadd.f32 %v737, %v764
        %766 = vset.pattern.permute.xlu0 20
        %767 = vperm.xlu0 %766, %v624
        %v768 = vpop.permute.xlu0 %767
        %v770 = vperm.slane %v586, 0
        %v771 = vmul.f32 %v768, %v770
        %v772 = vadd.f32 %v744, %v771
        %773 = vset.pattern.permute.xlu0 21
        %774 = vperm.xlu0 %773, %v624
        %v775 = vpop.permute.xlu0 %774
        %v777 = vperm.slane %v586, 1
        %v778 = vmul.f32 %v775, %v777
        %v779 = vadd.f32 %v751, %v778
        %780 = vset.pattern.permute.xlu0 22
        %781 = vperm.xlu0 %780, %v624
        %v782 = vpop.permute.xlu0 %781
        %v784 = vperm.slane %v586, 2
        %v785 = vmul.f32 %v782, %v784
        %v786 = vadd.f32 %v758, %v785
        %787 = vset.pattern.permute.xlu0 23
        %788 = vperm.xlu0 %787, %v624
        %v789 = vpop.permute.xlu0 %788
        %v791 = vperm.slane %v586, 3
        %v792 = vmul.f32 %v789, %v791
        %v793 = vadd.f32 %v765, %v792
        %794 = vset.pattern.permute.xlu0 24
        %795 = vperm.xlu0 %794, %v624
        %v796 = vpop.permute.xlu0 %795
        %v798 = vperm.slane %v623, 0
        %v799 = vmul.f32 %v796, %v798
        %v800 = vadd.f32 %v772, %v799
        %801 = vset.pattern.permute.xlu0 25
        %802 = vperm.xlu0 %801, %v624
        %v803 = vpop.permute.xlu0 %802
        %v805 = vperm.slane %v623, 1
        %v806 = vmul.f32 %v803, %v805
        %v807 = vadd.f32 %v779, %v806
        %808 = vset.pattern.permute.xlu0 26
        %809 = vperm.xlu0 %808, %v624
        %v810 = vpop.permute.xlu0 %809
        %v812 = vperm.slane %v623, 2
        %v813 = vmul.f32 %v810, %v812
        %v814 = vadd.f32 %v786, %v813
        %815 = vset.pattern.permute.xlu0 27
        %816 = vperm.xlu0 %815, %v624
        %v817 = vpop.permute.xlu0 %816
        %v819 = vperm.slane %v623, 3
        %v820 = vmul.f32 %v817, %v819
        %v821 = vadd.f32 %v793, %v820
        %822 = vset.pattern.permute.xlu0 28
        %823 = vperm.xlu0 %822, %v624
        %v824 = vpop.permute.xlu0 %823
        %v826 = vperm.slane %v587, 0
        %v827 = vmul.f32 %v824, %v826
        %v828 = vadd.f32 %v800, %v827
        %829 = vset.pattern.permute.xlu0 29
        %830 = vperm.xlu0 %829, %v624
        %v831 = vpop.permute.xlu0 %830
        %v833 = vperm.slane %v587, 1
        %v834 = vmul.f32 %v831, %v833
        %v835 = vadd.f32 %v807, %v834
        %836 = vset.pattern.permute.xlu0 30
        %837 = vperm.xlu0 %836, %v624
        %v838 = vpop.permute.xlu0 %837
        %v840 = vperm.slane %v587, 2
        %v841 = vmul.f32 %v838, %v840
        %v842 = vadd.f32 %v814, %v841
        %843 = vset.pattern.permute.xlu0 31
        %844 = vperm.xlu0 %843, %v624
        %v845 = vpop.permute.xlu0 %844
        %v847 = vperm.slane %v587, 3
        %v848 = vmul.f32 %v845, %v847
        %v849 = vadd.f32 %v821, %v848
        %850 = vset.pattern.permute.xlu0 32
        %851 = vperm.xlu0 %850, %v624
        %v852 = vpop.permute.xlu0 %851
        %v854 = vperm.slane %v588, 0
        %v855 = vmul.f32 %v852, %v854
        %v856 = vadd.f32 %v828, %v855
        %857 = vset.pattern.permute.xlu0 33
        %858 = vperm.xlu0 %857, %v624
        %v859 = vpop.permute.xlu0 %858
        %v861 = vperm.slane %v588, 1
        %v862 = vmul.f32 %v859, %v861
        %v863 = vadd.f32 %v835, %v862
        %864 = vset.pattern.permute.xlu0 34
        %865 = vperm.xlu0 %864, %v624
        %v866 = vpop.permute.xlu0 %865
        %v868 = vperm.slane %v588, 2
        %v869 = vmul.f32 %v866, %v868
        %v870 = vadd.f32 %v842, %v869
        %871 = vset.pattern.permute.xlu0 35
        %872 = vperm.xlu0 %871, %v624
        %v873 = vpop.permute.xlu0 %872
        %v875 = vperm.slane %v588, 3
        %v876 = vmul.f32 %v873, %v875
        %v877 = vadd.f32 %v849, %v876
        %v878 = vadd.f32 %v856, %v863
        %v879 = vadd.f32 %v870, %v877
        %v880 = vadd.f32 %v878, %v879
        %v881 = vld [vmem:[%s8] sm:$0xf]
        %883 = vset.pattern.permute.xlu0 0
        %884 = vperm.xlu0 %883, %v881
        %v885 = vpop.permute.xlu0 %884
        %v887 = vadd.f32 %v880, %v885
        %v888 = vmax.f32 %v585, %v586
        %v889 = vmax.f32 %v587, %v588
        %v890 = vmax.f32 %v888, %v889
        %v891 = vmax.f32 %v887, 0.0
        %vm892 = vcmask 519168
        %893 = vst.msk [vmem:[%s581] sm:$0xf] %vm892, %v891
        %v894 = vmax.f32 %v890, 0.0
        %895 = vst.msk [vmem:[%s581 + $0x4] sm:$0xf] %vm892, %v894
        %s896 = sand.u32 %s293, 1
        %s897 = scalar_lea.sflag [#allocation4], %s896
        %s898 = sand.u32 %s293, 1
        %s899 = smul.addr %s898, 8
        %s900 = scalar_lea.vmem [#allocation13], %s899
        // Predicated region
        $region81: #{tpu_custom_call.1} parent=55 // pred_check
          %p901 = pneg %p303
        $region82: #{tpu_custom_call.1} parent=55 // pred_check_branch
          %903 = sbr.rel (%p901) target = $region84
        $region83: #{tpu_custom_call.1} parent=55 // pred_region
          %905 = vsyncadd %s897, 0
          %s906 = sadd.s32 %s40, %s39
          %s907 = smul.addr %s906, 8
          %s908 = scalar_lea.hbm %s9, %s907
          %s910 = sshll.u32 %s900, 4
          %s911 = int_to_ptr.vmem [resolvable:$true] %s910
          %s912 = sshll.u32 %s908, 4
          %s913 = int_to_ptr.hbm [resolvable:$true] %s912
          %915 = dma.vmem_to_hbm [thread:$0]  %s911, 128, %s913, %s897
        $region84: #{tpu_custom_call.1} parent=55 // pred_fallthru
          _
      $region56: #{tpu_custom_call.1} parent=5 // pred_fallthru
        _
      %p916 = scmp.le.s32.totalorder 2, %s30
      // Predicated region
      $region85: #{tpu_custom_call.1} parent=5 // pred_check
        %p917 = pneg %p916
      $region86: #{tpu_custom_call.1} parent=5 // pred_check_branch
        %919 = sbr.rel (%p917) target = $region88
      $region87: #{tpu_custom_call.1} parent=5 // pred_region
        %s920 = ssub.s32 %s30, 2
        // Predicated region
        $region89: #{tpu_custom_call.1} parent=87 // pred_check
          %p921 = pneg %p309
        $region90: #{tpu_custom_call.1} parent=87 // pred_check_branch
          %923 = sbr.rel (%p921) target = $region92
        $region91: #{tpu_custom_call.1} parent=87 // pred_region
          %s924 = sand.u32 %s294, 1
          %s925 = scalar_lea.sflag [#allocation4], %s924
          %s926 = sand.u32 %s294, 1
          %s927 = smul.addr %s926, 8
          %s928 = scalar_lea.vmem [#allocation13], %s927
          %930 = dma.done %s925, 128
        $region92: #{tpu_custom_call.1} parent=87 // pred_fallthru
          _
      $region88: #{tpu_custom_call.1} parent=5 // pred_fallthru
        _
    $region6: #{tpu_custom_call.1} parent=1 // loop_footer
      %s34 = sadd.s32 1, %s30
    $region7: #{tpu_custom_call.1} parent=1 // loop_footer_branch
      %29 = sbr.rel target = $region3
    $region8: #{tpu_custom_call.1} parent=1 // loop_exit
      _
    %931 = vsyncpa [#allocation3], 1
    %s932 = scalar_lea.sflag [#allocation3], 1
    %933 = vsyncpa %s932, 1
    %934 = vsyncpa [#allocation6], 1
    %s935 = scalar_lea.sflag [#allocation6], 1
    %936 = vsyncpa %s935, 1
    %937 = vsyncpa [#allocation9], 1
    %s938 = scalar_lea.sflag [#allocation9], 1
    %939 = vsyncpa %s938, 1
    %940 = vsyncpa [#allocation12], 1
    %s941 = scalar_lea.sflag [#allocation12], 1
    %942 = vsyncpa %s941, 1
    %943 = vsyncpa [#allocation4], 1
    %s944 = scalar_lea.sflag [#allocation4], 1
    %945 = vsyncpa %s944, 1

</llo_original>
